<compile_context>
chip_gen: v7x
topology: tpu7x:2x2x1
jax: 0.10.0
libtpu: 0.0.40
codegen_flags: <defaults>
</compile_context>

<pallas_src>
import functools

import jax
import jax.numpy as jnp
from jax import lax
from jax.experimental import pallas as pl
from jax.experimental.pallas import tpu as pltpu

EPS = 1e-5
DW_ROW_TARGET = 64               # target output-row chunk for the depthwise kernel


def _cdiv(a, b):
    return (a + b - 1) // b


def _round_up(n, m):
    return ((n + m - 1) // m) * m


def _tpu_budget():
    """Per-generation (VMEM limit, matmul row-tile).  v5e/v6e: 128 MiB physical
    VMEM -> larger budget & tile; v7x (64 MiB) / unknown -> conservative."""
    try:
        vmem_cap = int(pltpu.get_tpu_info().vmem_capacity_bytes)
    except Exception:
        vmem_cap = 64 * 1024 * 1024
    if vmem_cap >= 100 * 1024 * 1024:
        return 80 * 1024 * 1024, 1024
    return 32 * 1024 * 1024, 512


VMEM_LIMIT, ROW_TILE = _tpu_budget()


def _apply_act(y, kind):
    if kind == "relu":
        return jnp.maximum(y, 0.0)
    if kind == "relu6":
        return jnp.clip(y, 0.0, 6.0)
    return y                      # "none"


# ---------------------------------------------------------------------------
# Kernel 1: (producer BN + act) -> conv-as-matmul (bf16 MXU) -> bf16 output
#           + per-channel (sum, sumsq) of the f32 accumulator, accumulated in
#           a per-half resident block across the "arbitrary" M-tile axis.
# Grid = (halves, tiles_per_half): the half axis is "parallel" so v7x's two
# TensorCores each own half of the M tiles (no effect on v5e/v6e).
# ---------------------------------------------------------------------------
def matmul_stats_kernel(x_ref, scale_ref, shift_ref, w_ref, o_ref, sum_ref, sq_ref,
                        *, act, total_rows, tile_rows, tiles_per_half, total_tiles,
                        has_dup):
    p = pl.program_id(0)
    t = pl.program_id(1)
    tile_idx = p * tiles_per_half + t          # unclamped; may equal total_tiles (dup)

    x = x_ref[...].astype(jnp.float32)
    x = _apply_act(x * scale_ref[...] + shift_ref[...], act)
    y = jnp.dot(x.astype(jnp.bfloat16), w_ref[...], preferred_element_type=jnp.float32)
    o_ref[...] = y.astype(o_ref.dtype)

    @pl.when(t == 0)
    def _init():
        sum_ref[...] = jnp.zeros_like(sum_ref)
        sq_ref[...] = jnp.zeros_like(sq_ref)

    def _acc(yy):
        sum_ref[...] += jnp.sum(yy, axis=0, keepdims=True)[jnp.newaxis]
        sq_ref[...] += jnp.sum(yy * yy, axis=0, keepdims=True)[jnp.newaxis]

    has_partial = (total_rows % tile_rows) != 0
    if has_partial or has_dup:
        # Only the last genuine tile (partial rows) and the possible duplicated
        # tile of an odd split need masking; full tiles skip the VPU pass.
        last_or_dup = tile_idx >= (total_tiles - 1)

        @pl.when(last_or_dup)
        def _masked():
            rows = lax.broadcasted_iota(jnp.int32, (tile_rows, 1), 0) + tile_idx * tile_rows
            _acc(jnp.where(rows < total_rows, y, 0.0))

        @pl.when(jnp.logical_not(last_or_dup))
        def _plain():
            _acc(y)
    else:
        _acc(y)


def matmul_raw_stats(x2d, scale, shift, w, act):
    M, K = x2d.shape
    cout = w.shape[1]

    if M <= ROW_TILE:
        tm = M
    else:
        tm = _round_up(_cdiv(M, _cdiv(M, ROW_TILE)), 8)   # balanced tiles, 8-aligned
    total_tiles = _cdiv(M, tm)
    halves = 2 if total_tiles >= 2 else 1
    tiles_per_half = _cdiv(total_tiles, halves)
    has_dup = halves * tiles_per_half > total_tiles       # odd split -> one dup tile

    def row_idx(p, t):
        idx = p * tiles_per_half + t
        if halves > 1:
            idx = jnp.minimum(idx, total_tiles - 1)        # clamp the dup tile
        return idx

    kernel = functools.partial(
        matmul_stats_kernel, act=act, total_rows=M, tile_rows=tm,
        tiles_per_half=tiles_per_half, total_tiles=total_tiles, has_dup=has_dup)

    raw, ssum, ssq = pl.pallas_call(
        kernel,
        out_shape=(jax.ShapeDtypeStruct((M, cout), jnp.bfloat16),
                   jax.ShapeDtypeStruct((halves, 1, cout), jnp.float32),
                   jax.ShapeDtypeStruct((halves, 1, cout), jnp.float32)),
        grid=(halves, tiles_per_half),
        in_specs=[pl.BlockSpec((tm, K), lambda p, t: (row_idx(p, t), 0)),
                  pl.BlockSpec((1, K), lambda p, t: (0, 0)),
                  pl.BlockSpec((1, K), lambda p, t: (0, 0)),
                  pl.BlockSpec((K, cout), lambda p, t: (0, 0))],
        out_specs=(pl.BlockSpec((tm, cout), lambda p, t: (row_idx(p, t), 0)),
                   pl.BlockSpec((1, 1, cout), lambda p, t: (p, 0, 0)),
                   pl.BlockSpec((1, 1, cout), lambda p, t: (p, 0, 0))),
        compiler_params=pltpu.CompilerParams(
            dimension_semantics=("parallel", "arbitrary"),
            vmem_limit_bytes=VMEM_LIMIT),
    )(x2d,
      scale.reshape(1, K).astype(jnp.float32),
      shift.reshape(1, K).astype(jnp.float32),
      w)
    return raw, jnp.sum(ssum, axis=(0, 1)), jnp.sum(ssq, axis=(0, 1))


# ---------------------------------------------------------------------------
# Kernel 2a: stride-1 depthwise 3x3, gridded over (batch, output-row chunks).
# Each chunk loads its rows plus two 1-row halo blocks; the padded plane is
# assembled in a bf16 VMEM scratch (ring-only zeroing), BN+act of the previous
# layer fused on the fly; taps accumulate in f32; bf16 output + f32 stats.
# ---------------------------------------------------------------------------
def dw_s1_kernel(xm_ref, xt_ref, xb_ref, scale_ref, shift_ref, w_ref,
                 o_ref, stat_ref, q_ref, *, prev_act, n_chunks):
    j = pl.program_id(1)
    R, W, C = o_ref.shape[1], o_ref.shape[2], o_ref.shape[3]
    sc = scale_ref[0]            # (1, C)
    sh = shift_ref[0]

    # Zero only the halo ring columns; interior rows are fully overwritten.
    q_ref[:, 0:1, :] = jnp.zeros((R + 2, 1, C), q_ref.dtype)
    q_ref[:, W + 1:W + 2, :] = jnp.zeros((R + 2, 1, C), q_ref.dtype)

    xm = _apply_act(xm_ref[0].astype(jnp.float32) * sc + sh, prev_act)
    q_ref[1:R + 1, 1:W + 1, :] = xm.astype(q_ref.dtype)

    @pl.when(j == 0)
    def _top_zero():
        q_ref[0:1, 1:W + 1, :] = jnp.zeros((1, W, C), q_ref.dtype)

    @pl.when(j > 0)
    def _top_halo():
        xt = _apply_act(xt_ref[0].astype(jnp.float32) * sc + sh, prev_act)
        q_ref[0:1, 1:W + 1, :] = xt.astype(q_ref.dtype)

    @pl.when(j == n_chunks - 1)
    def _bot_zero():
        q_ref[R + 1:R + 2, 1:W + 1, :] = jnp.zeros((1, W, C), q_ref.dtype)

    @pl.when(j < n_chunks - 1)
    def _bot_halo():
        xb = _apply_act(xb_ref[0].astype(jnp.float32) * sc + sh, prev_act)
        q_ref[R + 1:R + 2, 1:W + 1, :] = xb.astype(q_ref.dtype)

    acc = None
    for kh in range(3):
        for kw in range(3):
            term = q_ref[kh:kh + R, kw:kw + W, :].astype(jnp.float32) * w_ref[kh * 3 + kw]
            acc = term if acc is None else acc + term

    o_ref[...] = acc[jnp.newaxis].astype(o_ref.dtype)
    s1 = jnp.sum(jnp.sum(acc, axis=0), axis=0, keepdims=True)          # (1, C)
    s2 = jnp.sum(jnp.sum(acc * acc, axis=0), axis=0, keepdims=True)
    stat_ref[0:1, 0:1, 0:1, :] = s1.reshape(1, 1, 1, -1)
    stat_ref[0:1, 0:1, 1:2, :] = s2.reshape(1, 1, 1, -1)


# ---------------------------------------------------------------------------
# Kernel 2b: stride-2 depthwise 3x3, per batch element, polyphase planes built
# in bf16 VMEM scratch (ring-only zeroing) -> no tap tensor in HBM.
# ---------------------------------------------------------------------------
def dw_s2_kernel(*refs, n_phase, phase_meta, plane_cover, taps, prev_act):
    ph_refs = refs[:n_phase]
    scale_ref, shift_ref, w_ref, o_ref, stat_ref = refs[n_phase:n_phase + 5]
    q_refs = refs[n_phase + 5:n_phase + 9]

    ho, wo = o_ref.shape[1], o_ref.shape[2]
    sc = scale_ref[0]            # (1, C)
    sh = shift_ref[0]

    # Zero only the parts of each padded plane the interior write won't cover.
    for qi, cover in enumerate(plane_cover):
        q = q_refs[qi]
        Hq, Wq, C = q.shape
        if cover is None:
            q[...] = jnp.zeros_like(q)
            continue
        r0, c0, h, w = cover
        if r0 > 0:
            q[0:r0, :, :] = jnp.zeros((r0, Wq, C), q.dtype)
        if r0 + h < Hq:
            q[r0 + h:Hq, :, :] = jnp.zeros((Hq - r0 - h, Wq, C), q.dtype)
        if c0 > 0:
            q[r0:r0 + h, 0:c0, :] = jnp.zeros((h, c0, C), q.dtype)
        if c0 + w < Wq:
            q[r0:r0 + h, c0 + w:Wq, :] = jnp.zeros((h, Wq - c0 - w, C), q.dtype)

    for ph_ref, (qi, r0, c0, h, w) in zip(ph_refs, phase_meta):
        v = _apply_act(ph_ref[0].astype(jnp.float32) * sc + sh, prev_act)
        q_refs[qi][r0:r0 + h, c0:c0 + w, :] = v.astype(q_refs[qi].dtype)

    acc = None
    for k, (qi, dr, dc) in enumerate(taps):
        term = q_refs[qi][dr:dr + ho, dc:dc + wo, :].astype(jnp.float32) * w_ref[k]
        acc = term if acc is None else acc + term

    o_ref[...] = acc[jnp.newaxis].astype(o_ref.dtype)
    s1 = jnp.sum(jnp.sum(acc, axis=0), axis=0, keepdims=True)
    s2 = jnp.sum(jnp.sum(acc * acc, axis=0), axis=0, keepdims=True)
    stat_ref[0:1, 0:1, :] = s1.reshape(1, 1, -1)
    stat_ref[0:1, 1:2, :] = s2.reshape(1, 1, -1)


def _row_chunk(h, target=DW_ROW_TARGET):
    best = 1
    for r in range(1, min(h, target) + 1):
        if h % r == 0:
            best = r
    return best


def depthwise_raw_stats(x_raw, scale, shift, prev_act, dw_w, stride):
    N, H, W, C = x_raw.shape
    Ho = (H - 1) // stride + 1
    Wo = (W - 1) // stride + 1
    scale3 = scale.reshape(1, 1, C).astype(jnp.float32)
    shift3 = shift.reshape(1, 1, C).astype(jnp.float32)

    if stride == 1:
        R = _row_chunk(H)
        n_chunks = H // R
        kernel = functools.partial(dw_s1_kernel, prev_act=prev_act, n_chunks=n_chunks)
        dw_raw, stats = pl.pallas_call(
            kernel,
            out_shape=(jax.ShapeDtypeStruct((N, H, W, C), jnp.bfloat16),
                       jax.ShapeDtypeStruct((N, n_chunks, 2, C), jnp.float32)),
            grid=(N, n_chunks),
            in_specs=[
                pl.BlockSpec((1, R, W, C), lambda n, j: (n, j, 0, 0)),
                pl.BlockSpec((1, 1, W, C),
                             lambda n, j: (n, jnp.maximum(j * R - 1, 0), 0, 0)),
                pl.BlockSpec((1, 1, W, C),
                             lambda n, j: (n, jnp.minimum(j * R + R, H - 1), 0, 0)),
                pl.BlockSpec((1, 1, C), lambda n, j: (0, 0, 0)),
                pl.BlockSpec((1, 1, C), lambda n, j: (0, 0, 0)),
                pl.BlockSpec((9, 1, C), lambda n, j: (0, 0, 0)),
            ],
            out_specs=(pl.BlockSpec((1, R, W, C), lambda n, j: (n, j, 0, 0)),
                       pl.BlockSpec((1, 1, 2, C), lambda n, j: (n, j, 0, 0))),
            scratch_shapes=[pltpu.VMEM((R + 2, W + 2, C), jnp.bfloat16)],
            compiler_params=pltpu.CompilerParams(
                dimension_semantics=("parallel", "parallel"),
                vmem_limit_bytes=VMEM_LIMIT),
        )(x_raw, x_raw, x_raw, scale3, shift3, dw_w)
        dsum = jnp.sum(stats[:, :, 0, :], axis=(0, 1))
        dsq = jnp.sum(stats[:, :, 1, :], axis=(0, 1))
        return dw_raw, dsum, dsq

    # stride == 2: polyphase decomposition of the zero-padded input; every tap
    # of the stride-2 conv becomes a static contiguous slice of one plane.
    phases, phase_meta = [], []
    plane_cover = [None, None, None, None]
    for a in (0, 1):                 # padded-domain row parity
        for b in (0, 1):             # padded-domain col parity
            ph = x_raw[:, (1 - a)::2, (1 - b)::2, :]
            h, w = ph.shape[1], ph.shape[2]
            if h == 0 or w == 0:
                continue             # empty plane (1-pixel inputs): scratch stays zero
            qi = 2 * a + b
            phases.append(ph)
            phase_meta.append((qi, 1 - a, 1 - b, h, w))
            plane_cover[qi] = (1 - a, 1 - b, h, w)

    kmap = {0: (0, 0), 1: (1, 0), 2: (0, 1)}     # kernel offset -> (parity, shift)
    taps = []
    for kh in range(3):
        a, dr = kmap[kh]
        for kw in range(3):
            b, dc = kmap[kw]
            taps.append((2 * a + b, dr, dc))

    n_phase = len(phases)
    kernel = functools.partial(dw_s2_kernel, n_phase=n_phase,
                               phase_meta=tuple(phase_meta),
                               plane_cover=tuple(plane_cover),
                               taps=tuple(taps), prev_act=prev_act)

    in_specs = [pl.BlockSpec((1,) + ph.shape[1:], lambda n: (n, 0, 0, 0)) for ph in phases]
    in_specs += [pl.BlockSpec((1, 1, C), lambda n: (0, 0, 0)),
                 pl.BlockSpec((1, 1, C), lambda n: (0, 0, 0)),
                 pl.BlockSpec((9, 1, C), lambda n: (0, 0, 0))]

    dw_raw, stats = pl.pallas_call(
        kernel,
        out_shape=(jax.ShapeDtypeStruct((N, Ho, Wo, C), jnp.bfloat16),
                   jax.ShapeDtypeStruct((N, 2, C), jnp.float32)),
        grid=(N,),
        in_specs=in_specs,
        out_specs=(pl.BlockSpec((1, Ho, Wo, C), lambda n: (n, 0, 0, 0)),
                   pl.BlockSpec((1, 2, C), lambda n: (n, 0, 0))),
        scratch_shapes=[pltpu.VMEM((Ho + 1, Wo + 1, C), jnp.bfloat16) for _ in range(4)],
        compiler_params=pltpu.CompilerParams(
            dimension_semantics=("parallel",),
            vmem_limit_bytes=VMEM_LIMIT),
    )(*phases, scale3, shift3, dw_w)

    dsum = jnp.sum(stats[:, 0, :], axis=0)
    dsq = jnp.sum(stats[:, 1, :], axis=0)
    return dw_raw, dsum, dsq


# ---------------------------------------------------------------------------
# Kernel 3: head = last BN + ReLU6 + AdaptiveAvgPool2d((1,1)) + Linear,
# tiled over the batch.
# ---------------------------------------------------------------------------
def head_kernel(x_ref, scale_ref, shift_ref, w_ref, b_ref, o_ref):
    y = jnp.clip(x_ref[0].astype(jnp.float32) * scale_ref[0] + shift_ref[0], 0.0, 6.0)
    pooled = jnp.mean(y, axis=0, keepdims=True)                        # (1, C)
    o_ref[0] = jnp.dot(pooled, w_ref[...], preferred_element_type=jnp.float32) + b_ref[...]


def head_call(x_raw, scale, shift, fc_w, fc_b):
    N, H, W, C = x_raw.shape
    P = fc_w.shape[1]
    HW = H * W
    x3 = x_raw.reshape(N, HW, C)
    out = pl.pallas_call(
        head_kernel,
        out_shape=jax.ShapeDtypeStruct((N, 1, P), jnp.float32),
        grid=(N,),
        in_specs=[pl.BlockSpec((1, HW, C), lambda n: (n, 0, 0)),
                  pl.BlockSpec((1, 1, C), lambda n: (0, 0, 0)),
                  pl.BlockSpec((1, 1, C), lambda n: (0, 0, 0)),
                  pl.BlockSpec((C, P), lambda n: (0, 0)),
                  pl.BlockSpec((1, P), lambda n: (0, 0))],
        out_specs=pl.BlockSpec((1, 1, P), lambda n: (n, 0, 0)),
        compiler_params=pltpu.CompilerParams(
            dimension_semantics=("parallel",),
            vmem_limit_bytes=VMEM_LIMIT),
    )(x3, scale.reshape(1, 1, C).astype(jnp.float32),
      shift.reshape(1, 1, C).astype(jnp.float32),
      fc_w, fc_b.reshape(1, P))
    return out.reshape(N, P)


# ---------------------------------------------------------------------------
# JAX glue
# ---------------------------------------------------------------------------
def _bn_scale_shift(ssum, ssq, count, gamma, beta):
    # Single-pass batch statistics (biased variance, PyTorch training mode).
    mean = ssum / count
    var = jnp.maximum(ssq / count - mean * mean, 0.0)
    scale = gamma * lax.rsqrt(var + EPS)
    shift = beta - mean * scale
    return scale, shift


def conv1_raw_stats(x, w):
    # BasicConv2d: Conv2d(3, C, 3, stride=2, padding=1); im2col in bf16.
    # TODO(synk): fuse the im2col tap construction into a Pallas kernel
    # (same polyphase trick as the depthwise kernel) to avoid the HBM round trip.
    N, H, W, Cin = x.shape
    Ho = (H - 1) // 2 + 1
    Wo = (W - 1) // 2 + 1
    xp = jnp.pad(x.astype(jnp.bfloat16), ((0, 0), (1, 1), (1, 1), (0, 0)))
    taps = []
    for kh in range(3):
        for kw in range(3):
            taps.append(xp[:, kh:kh + 2 * (Ho - 1) + 1:2, kw:kw + 2 * (Wo - 1) + 1:2, :])
    patches = jnp.stack(taps, axis=-2)                 # (N, Ho, Wo, 9, Cin)
    cols = patches.reshape(N * Ho * Wo, 9 * Cin)       # (M, 27) bf16, (kh, kw, cin) order
    K = w.shape[0]
    ident = jnp.ones((K,), jnp.float32)
    zero = jnp.zeros((K,), jnp.float32)
    raw, ssum, ssq = matmul_raw_stats(cols, ident, zero, w, act="none")
    return raw.reshape(N, Ho, Wo, -1), ssum, ssq


# ---------------------------------------------------------------------------
# Parameters (deterministic kaiming-style init, true channel counts — no pad)
# ---------------------------------------------------------------------------
def make_params(key, alpha, num_classes):
    def c(n):
        return int(n * alpha)

    keys = iter(jax.random.split(key, 64))
    c32 = c(32)

    conv1_w = (jax.random.normal(next(keys), (27, c32), jnp.float32)
               * jnp.sqrt(2.0 / (c32 * 9))).astype(jnp.bfloat16)

    params = {
        "conv1_w": conv1_w,
        "conv1_g": jnp.ones((c32,), jnp.float32),
        "conv1_b": jnp.zeros((c32,), jnp.float32),
        "num_classes": num_classes,
    }

    cfg = ([(c(32), c(64), 1),
            (c(64), c(128), 2), (c(128), c(128), 1),
            (c(128), c(256), 2), (c(256), c(256), 1),
            (c(256), c(512), 2)]
           + [(c(512), c(512), 1)] * 5
           + [(c(512), c(1024), 2), (c(1024), c(1024), 2)])

    blocks = []
    for (ci, co, s) in cfg:
        dw_w = jax.random.normal(next(keys), (9, 1, ci), jnp.float32) * jnp.sqrt(2.0 / (ci * 9))
        pw_w = (jax.random.normal(next(keys), (ci, co), jnp.float32)
                * jnp.sqrt(2.0 / co)).astype(jnp.bfloat16)
        blocks.append(dict(
            dw_w=dw_w,
            dw_g=jnp.ones((ci,), jnp.float32), dw_b=jnp.zeros((ci,), jnp.float32),
            pw_w=pw_w,
            pw_g=jnp.ones((co,), jnp.float32), pw_b=jnp.zeros((co,), jnp.float32),
            stride=s,
        ))
    params["blocks"] = blocks

    c1024 = c(1024)
    params["fc_w"] = jax.random.normal(next(keys), (c1024, num_classes), jnp.float32) * 0.01
    params["fc_b"] = jnp.zeros((num_classes,), jnp.float32)
    return params


# ---------------------------------------------------------------------------
# Forward pass
# ---------------------------------------------------------------------------
def mobilenet_forward(params, x_nchw):
    x = jnp.transpose(x_nchw, (0, 2, 3, 1)).astype(jnp.float32)     # NCHW -> NHWC

    raw, ssum, ssq = conv1_raw_stats(x, params["conv1_w"])
    count = raw.shape[0] * raw.shape[1] * raw.shape[2]
    gamma, beta = params["conv1_g"], params["conv1_b"]
    act = "relu"                 # BasicConv2d uses ReLU; Depthwise stages use ReLU6

    for blk in params["blocks"]:
        scale, shift = _bn_scale_shift(ssum, ssq, count, gamma, beta)
        dw_raw, dsum, dsq = depthwise_raw_stats(raw, scale, shift, act,
                                                blk["dw_w"], blk["stride"])
        N, Hd, Wd, Cd = dw_raw.shape
        m = N * Hd * Wd
        dscale, dshift = _bn_scale_shift(dsum, dsq, m, blk["dw_g"], blk["dw_b"])
        pw_raw, psum, psq = matmul_raw_stats(dw_raw.reshape(m, Cd), dscale, dshift,
                                             blk["pw_w"], act="relu6")
        raw = pw_raw.reshape(N, Hd, Wd, -1)
        ssum, ssq, count = psum, psq, m
        gamma, beta = blk["pw_g"], blk["pw_b"]
        act = "relu6"

    scale, shift = _bn_scale_shift(ssum, ssq, count, gamma, beta)
    logits = head_call(raw, scale, shift, params["fc_w"], params["fc_b"])
    return logits


if __name__ == "__main__":
    key = jax.random.PRNGKey(0)
    kx, kp = jax.random.split(key)

    # Small but architecture-consistent: 6 stride-2 stages take 32x32 -> 1x1.
    x = jax.random.normal(kx, (2, 3, 32, 32), dtype=jnp.float32)    # NCHW like PyTorch
    params = make_params(kp, alpha=0.25, num_classes=2)

    out = mobilenet_forward(params, x)
    out = jax.block_until_ready(out)
    assert out.shape == (2, 2), out.shape
    print("KERNEL_OK")
</pallas_src>

<mosaic_0001>
module attributes {stable_mosaic.version = 11 : i64} {
  func.func @matmul_stats_kernel(%arg0: i32, %arg1: i32, %arg2: memref<512x27xbf16, #tpu.memory_space<vmem>>, %arg3: memref<1x27xf32, #tpu.memory_space<vmem>>, %arg4: memref<1x27xf32, #tpu.memory_space<vmem>>, %arg5: memref<27x8xbf16, #tpu.memory_space<vmem>>, %arg6: memref<512x8xbf16, #tpu.memory_space<vmem>>, %arg7: memref<1x1x8xf32, #tpu.memory_space<vmem>>, %arg8: memref<1x1x8xf32, #tpu.memory_space<vmem>>) attributes {dimension_semantics = [#tpu.dimension_semantics<parallel>, #tpu.dimension_semantics<arbitrary>], iteration_bounds = array<i64: 1, 1>, scalar_prefetch = 0 : i64, scratch_operands = 0 : i64, tpu.core_type = #tpu.core_type<tc>, window_params = [{transform_indices = @transform_0, window_bounds = array<i64: 512, 27>}, {pipeline_mode = #tpu.pipeline_mode<synchronous>, transform_indices = @transform_1, window_bounds = array<i64: 1, 27>}, {pipeline_mode = #tpu.pipeline_mode<synchronous>, transform_indices = @transform_2, window_bounds = array<i64: 1, 27>}, {pipeline_mode = #tpu.pipeline_mode<synchronous>, transform_indices = @transform_3, window_bounds = array<i64: 27, 8>}, {transform_indices = @transform_4, window_bounds = array<i64: 512, 8>}, {transform_indices = @transform_5, window_bounds = array<i64: 1, 1, 8>}, {transform_indices = @transform_6, window_bounds = array<i64: 1, 1, 8>}]} {
    %c0 = arith.constant 0 : index
    %c0_0 = arith.constant 0 : index
    %0 = vector.load %arg2[%c0, %c0_0] : memref<512x27xbf16, #tpu.memory_space<vmem>>, vector<512x27xbf16>
    %1 = arith.extf %0 : vector<512x27xbf16> to vector<512x27xf32>
    %c0_1 = arith.constant 0 : index
    %c0_2 = arith.constant 0 : index
    %2 = vector.load %arg3[%c0_1, %c0_2] : memref<1x27xf32, #tpu.memory_space<vmem>>, vector<1x27xf32>
    %3 = vector.broadcast %2 : vector<1x27xf32> to vector<512x27xf32>
    %4 = arith.mulf %1, %3 : vector<512x27xf32>
    %c0_3 = arith.constant 0 : index
    %c0_4 = arith.constant 0 : index
    %5 = vector.load %arg4[%c0_3, %c0_4] : memref<1x27xf32, #tpu.memory_space<vmem>>, vector<1x27xf32>
    %6 = vector.broadcast %5 : vector<1x27xf32> to vector<512x27xf32>
    %7 = arith.addf %4, %6 : vector<512x27xf32>
    %8 = arith.truncf %7 : vector<512x27xf32> to vector<512x27xbf16>
    %c0_5 = arith.constant 0 : index
    %c0_6 = arith.constant 0 : index
    %9 = vector.load %arg5[%c0_5, %c0_6] : memref<27x8xbf16, #tpu.memory_space<vmem>>, vector<27x8xbf16>
    %cst = arith.constant dense<0.000000e+00> : vector<512x8xf32>
    %10 = tpu.matmul %8, %9, %cst {dimension_numbers = #tpu.dot_dimension_numbers<[1], [0], [0], [1], [0, 0, 1, 1], [], []>} : vector<512x27xbf16>, vector<27x8xbf16>, vector<512x8xf32> -> vector<512x8xf32>
    %11 = arith.truncf %10 : vector<512x8xf32> to vector<512x8xbf16>
    %c0_7 = arith.constant 0 : index
    %c0_8 = arith.constant 0 : index
    %12 = vector.load %arg6[%c0_7, %c0_8] : memref<512x8xbf16, #tpu.memory_space<vmem>>, vector<512x8xbf16>
    tpu.vector_store %arg6[%c0_7, %c0_8], %11 {strides = array<i32>} : memref<512x8xbf16, #tpu.memory_space<vmem>>, vector<512x8xbf16>,
    %c0_i32 = arith.constant 0 : i32
    %13 = arith.cmpi eq, %arg1, %c0_i32 : i32
    %14 = arith.extui %13 : i1 to i32
    %c0_i32_9 = arith.constant 0 : i32
    %15 = arith.cmpi ne, %14, %c0_i32_9 : i32
    scf.if %15 {
      %cst_24 = arith.constant 0.000000e+00 : f32
      %29 = vector.broadcast %cst_24 : f32 to vector<1x1x8xf32>
      %c0_25 = arith.constant 0 : index
      %c0_26 = arith.constant 0 : index
      %c0_27 = arith.constant 0 : index
      %30 = vector.load %arg7[%c0_25, %c0_26, %c0_27] : memref<1x1x8xf32, #tpu.memory_space<vmem>>, vector<1x1x8xf32>
      tpu.vector_store %arg7[%c0_25, %c0_26, %c0_27], %29 {strides = array<i32>} : memref<1x1x8xf32, #tpu.memory_space<vmem>>, vector<1x1x8xf32>,
      %cst_28 = arith.constant 0.000000e+00 : f32
      %31 = vector.broadcast %cst_28 : f32 to vector<1x1x8xf32>
      %c0_29 = arith.constant 0 : index
      %c0_30 = arith.constant 0 : index
      %c0_31 = arith.constant 0 : index
      %32 = vector.load %arg8[%c0_29, %c0_30, %c0_31] : memref<1x1x8xf32, #tpu.memory_space<vmem>>, vector<1x1x8xf32>
      tpu.vector_store %arg8[%c0_29, %c0_30, %c0_31], %31 {strides = array<i32>} : memref<1x1x8xf32, #tpu.memory_space<vmem>>, vector<1x1x8xf32>,
    } else {
    }
    %c0_10 = arith.constant 0 : index
    %c0_11 = arith.constant 0 : index
    %c0_12 = arith.constant 0 : index
    %16 = vector.load %arg7[%c0_10, %c0_11, %c0_12] : memref<1x1x8xf32, #tpu.memory_space<vmem>>, vector<1x1x8xf32>
    %cst_13 = arith.constant dense<0.000000e+00> : vector<8xf32>
    %17 = vector.multi_reduction <add>, %10, %cst_13 [0] : vector<512x8xf32> to vector<8xf32>
    %18 = vector.shape_cast %17 : vector<8xf32> to vector<1x8xf32>
    %19 = vector.shape_cast %18 : vector<1x8xf32> to vector<1x1x8xf32>
    %20 = arith.addf %16, %19 : vector<1x1x8xf32>
    %c0_14 = arith.constant 0 : index
    %c0_15 = arith.constant 0 : index
    %c0_16 = arith.constant 0 : index
    %21 = vector.load %arg7[%c0_14, %c0_15, %c0_16] : memref<1x1x8xf32, #tpu.memory_space<vmem>>, vector<1x1x8xf32>
    tpu.vector_store %arg7[%c0_14, %c0_15, %c0_16], %20 {strides = array<i32>} : memref<1x1x8xf32, #tpu.memory_space<vmem>>, vector<1x1x8xf32>,
    %c0_17 = arith.constant 0 : index
    %c0_18 = arith.constant 0 : index
    %c0_19 = arith.constant 0 : index
    %22 = vector.load %arg8[%c0_17, %c0_18, %c0_19] : memref<1x1x8xf32, #tpu.memory_space<vmem>>, vector<1x1x8xf32>
    %23 = arith.mulf %10, %10 : vector<512x8xf32>
    %cst_20 = arith.constant dense<0.000000e+00> : vector<8xf32>
    %24 = vector.multi_reduction <add>, %23, %cst_20 [0] : vector<512x8xf32> to vector<8xf32>
    %25 = vector.shape_cast %24 : vector<8xf32> to vector<1x8xf32>
    %26 = vector.shape_cast %25 : vector<1x8xf32> to vector<1x1x8xf32>
    %27 = arith.addf %22, %26 : vector<1x1x8xf32>
    %c0_21 = arith.constant 0 : index
    %c0_22 = arith.constant 0 : index
    %c0_23 = arith.constant 0 : index
    %28 = vector.load %arg8[%c0_21, %c0_22, %c0_23] : memref<1x1x8xf32, #tpu.memory_space<vmem>>, vector<1x1x8xf32>
    tpu.vector_store %arg8[%c0_21, %c0_22, %c0_23], %27 {strides = array<i32>} : memref<1x1x8xf32, #tpu.memory_space<vmem>>, vector<1x1x8xf32>,
    return
  }
  func.func @transform_0(%arg0: i32, %arg1: i32) -> (i32, i32) {
    %c1_i32 = arith.constant 1 : i32
    %0 = arith.muli %arg0, %c1_i32 : i32
    %1 = arith.addi %0, %arg1 : i32
    %c0_i32 = arith.constant 0 : i32
    %c0_i32_0 = arith.constant 0 : i32
    return %1, %c0_i32 : i32, i32
  }
  func.func @transform_1(%arg0: i32, %arg1: i32) -> (i32, i32) {
    %c0_i32 = arith.constant 0 : i32
    %c0_i32_0 = arith.constant 0 : i32
    %c0_i32_1 = arith.constant 0 : i32
    return %c0_i32, %c0_i32_0 : i32, i32
  }
  func.func @transform_2(%arg0: i32, %arg1: i32) -> (i32, i32) {
    %c0_i32 = arith.constant 0 : i32
    %c0_i32_0 = arith.constant 0 : i32
    %c0_i32_1 = arith.constant 0 : i32
    return %c0_i32, %c0_i32_0 : i32, i32
  }
  func.func @transform_3(%arg0: i32, %arg1: i32) -> (i32, i32) {
    %c0_i32 = arith.constant 0 : i32
    %c0_i32_0 = arith.constant 0 : i32
    %c0_i32_1 = arith.constant 0 : i32
    return %c0_i32, %c0_i32_0 : i32, i32
  }
  func.func @transform_4(%arg0: i32, %arg1: i32) -> (i32, i32) {
    %c1_i32 = arith.constant 1 : i32
    %0 = arith.muli %arg0, %c1_i32 : i32
    %1 = arith.addi %0, %arg1 : i32
    %c0_i32 = arith.constant 0 : i32
    %c0_i32_0 = arith.constant 0 : i32
    return %1, %c0_i32 : i32, i32
  }
  func.func @transform_5(%arg0: i32, %arg1: i32) -> (i32, i32, i32) {
    %c0_i32 = arith.constant 0 : i32
    %c0_i32_0 = arith.constant 0 : i32
    %c0_i32_1 = arith.constant 0 : i32
    return %arg0, %c0_i32, %c0_i32_0 : i32, i32, i32
  }
  func.func @transform_6(%arg0: i32, %arg1: i32) -> (i32, i32, i32) {
    %c0_i32 = arith.constant 0 : i32
    %c0_i32_0 = arith.constant 0 : i32
    %c0_i32_1 = arith.constant 0 : i32
    return %arg0, %c0_i32, %c0_i32_0 : i32, i32, i32
  }
}

</mosaic_0001>

<llo_original>
// kernel: tpu_custom_call.1
$region0: #{tpu_custom_call.1}
  #allocation0 [shape = 'u32[]', space=smem, size = 0x4, offset = 0x4, fixed_abs, tag = 'smem constant byte address 0x4 - core index']
  #allocation1 [shape = 'u32[144,128]{1,0:T(1,128)}', space=vmem, size = 0x12000, scoped, tag = 'internal scratch']
  %s0 = inlined_call_operand.vmem [shape: bf16[512,27], index: 0, kind: input, shape index: {}]
  %s1 = inlined_call_operand.vmem [shape: f32[1,27], index: 1, kind: input, shape index: {}]
  %s2 = inlined_call_operand.vmem [shape: f32[1,27], index: 2, kind: input, shape index: {}]
  %s3 = inlined_call_operand.vmem [shape: bf16[27,8], index: 3, kind: input, shape index: {}]
  %s4 = inlined_call_operand.vmem [shape: bf16[512,8], index: 4, kind: output, shape index: {0}]
  %s5 = inlined_call_operand.hbm [shape: f32[1,1,8], index: 5, kind: output, shape index: {1}]
  %s6 = inlined_call_operand.hbm [shape: f32[1,1,8], index: 6, kind: output, shape index: {2}]
  %7 = xla_tuple %s4, %s5, %s6
  %s8 = sld [smem:[#allocation0]]
  $region46: #{tpu_custom_call.1} parent=0
    _
  %s10 = ssub.s32 1, %s8
  %s11 = scalar_select 0, %s10, %s8
  $region1: #{tpu_custom_call.1} parent=0
    #allocation2 [shape = 'u8[512]{0}', space=vmem, size = 0x400, scoped, tag = 'output window, operand 1, single buffered']
    #allocation3 [shape = 's32[1]{0}', space=sflag, size = 0x4, scoped, tag = 'scoped memory for tpu_custom_call.1']
    #allocation4 [shape = 'u8[512]{0}', space=vmem, size = 0x400, scoped, tag = 'output window, operand 2, single buffered']
    #allocation5 [shape = 's32[1]{0}', space=sflag, size = 0x4, scoped, tag = 'scoped memory for tpu_custom_call.1']
    %12 = vsyncpa [#allocation3], 0
    %13 = vsyncpa [#allocation5], 0
    // Predicated region
    $region2: #{tpu_custom_call.1} parent=1 // pred_check
      _
    $region3: #{tpu_custom_call.1} parent=1 // pred_check_branch
      %15 = sbr.rel (0) target = $region5
    $region4: #{tpu_custom_call.1} parent=1 // pred_region
      %s16 = sadd.s32 0, 0
      %s17 = smul.u32 64, %s16
      %p18 = scmp.lt.s32.totalorder %s17, 63
      %s19 = scalar_select %p18, %s17, 63
      %s20 = smul.addr %s19, 4
      %s21 = scalar_lea.vmem %s0, %s20
      %s22 = sadd.s32 0, 0
      %s23 = smul.u32 64, %s22
    $region5: #{tpu_custom_call.1} parent=1 // pred_fallthru
      _
    // Predicated region
    $region6: #{tpu_custom_call.1} parent=1 // pred_check
      _
    $region7: #{tpu_custom_call.1} parent=1 // pred_check_branch
      %25 = sbr.rel (0) target = $region9
    $region8: #{tpu_custom_call.1} parent=1 // pred_region
      _
    $region9: #{tpu_custom_call.1} parent=1 // pred_fallthru
      _
    // Predicated region
    $region10: #{tpu_custom_call.1} parent=1 // pred_check
      _
    $region11: #{tpu_custom_call.1} parent=1 // pred_check_branch
      %27 = sbr.rel (0) target = $region13
    $region12: #{tpu_custom_call.1} parent=1 // pred_region
      _
    $region13: #{tpu_custom_call.1} parent=1 // pred_fallthru
      _
    // Predicated region
    $region14: #{tpu_custom_call.1} parent=1 // pred_check
      _
    $region15: #{tpu_custom_call.1} parent=1 // pred_check_branch
      %29 = sbr.rel (0) target = $region17
    $region16: #{tpu_custom_call.1} parent=1 // pred_region
      _
    $region17: #{tpu_custom_call.1} parent=1 // pred_fallthru
      _
    %s30 = sadd.s32 0, 0
    %s31 = smul.u32 64, %s30
    %p32 = scmp.lt.s32.totalorder %s31, 63
    %s33 = scalar_select %p32, %s31, 63
    %s34 = smul.addr %s33, 4
    %s35 = scalar_lea.vmem %s0, %s34
    %s36 = sadd.s32 0, 0
    %s37 = smul.u32 64, %s36
    %p38 = scmp.lt.s32.totalorder %s37, 63
    %s39 = scalar_select %p38, %s37, 63
    %s40 = smul.addr %s39, 4
    %s41 = scalar_lea.vmem %s4, %s40
    %s42 = sadd.s32 0, 0
    %s43 = smul.u32 64, %s42
    %p44 = scmp.lt.s32.totalorder %s43, 63
    %s45 = scalar_select %p44, %s43, 63
    %s46 = smul.addr %s45, 4
    %s47 = scalar_lea.vmem %s0, %s46
    %s48 = sadd.s32 0, 0
    %s49 = smul.u32 64, %s48
    %s50 = sadd.s32 0, 0
    %s51 = smul.u32 64, %s50
    %p52 = scmp.lt.s32.totalorder %s51, 63
    %s53 = scalar_select %p52, %s51, 63
    %s54 = smul.addr %s53, 4
    %s55 = scalar_lea.vmem %s4, %s54
    %s56 = sadd.s32 0, 0
    %s57 = smul.u32 64, %s56
    %v59 = vld [vmem:[%s47] sm:$0xf]
    %v60 = vld [vmem:[%s47 + $0x4] sm:$0xf]
    %v61 = vld [vmem:[%s47 + $0x8] sm:$0xf]
    %v62 = vld [vmem:[%s47 + $0xc] sm:$0xf]
    %v63 = vld [vmem:[%s47 + $0x10] sm:$0xf]
    %v64 = vld [vmem:[%s47 + $0x14] sm:$0xf]
    %v65 = vld [vmem:[%s47 + $0x18] sm:$0xf]
    %v66 = vld [vmem:[%s47 + $0x1c] sm:$0xf]
    %v67 = vld [vmem:[%s47 + $0x20] sm:$0xf]
    %v68 = vld [vmem:[%s47 + $0x24] sm:$0xf]
    %v69 = vld [vmem:[%s47 + $0x28] sm:$0xf]
    %v70 = vld [vmem:[%s47 + $0x2c] sm:$0xf]
    %v71 = vld [vmem:[%s47 + $0x30] sm:$0xf]
    %v72 = vld [vmem:[%s47 + $0x34] sm:$0xf]
    %v73 = vld [vmem:[%s47 + $0x38] sm:$0xf]
    %v74 = vld [vmem:[%s47 + $0x3c] sm:$0xf]
    %v75 = vld [vmem:[%s47 + $0x40] sm:$0xf]
    %v76 = vld [vmem:[%s47 + $0x44] sm:$0xf]
    %v77 = vld [vmem:[%s47 + $0x48] sm:$0xf]
    %v78 = vld [vmem:[%s47 + $0x4c] sm:$0xf]
    %v79 = vld [vmem:[%s47 + $0x50] sm:$0xf]
    %v80 = vld [vmem:[%s47 + $0x54] sm:$0xf]
    %v81 = vld [vmem:[%s47 + $0x58] sm:$0xf]
    %v82 = vld [vmem:[%s47 + $0x5c] sm:$0xf]
    %v83 = vld [vmem:[%s47 + $0x60] sm:$0xf]
    %v84 = vld [vmem:[%s47 + $0x64] sm:$0xf]
    %v85 = vld [vmem:[%s47 + $0x68] sm:$0xf]
    %v86 = vld [vmem:[%s47 + $0x6c] sm:$0xf]
    %v87 = vld [vmem:[%s47 + $0x70] sm:$0xf]
    %v88 = vld [vmem:[%s47 + $0x74] sm:$0xf]
    %v89 = vld [vmem:[%s47 + $0x78] sm:$0xf]
    %v90 = vld [vmem:[%s47 + $0x7c] sm:$0xf]
    %v91 = vld [vmem:[%s47 + $0x80] sm:$0xf]
    %v92 = vld [vmem:[%s47 + $0x84] sm:$0xf]
    %v93 = vld [vmem:[%s47 + $0x88] sm:$0xf]
    %v94 = vld [vmem:[%s47 + $0x8c] sm:$0xf]
    %v95 = vld [vmem:[%s47 + $0x90] sm:$0xf]
    %v96 = vld [vmem:[%s47 + $0x94] sm:$0xf]
    %v97 = vld [vmem:[%s47 + $0x98] sm:$0xf]
    %v98 = vld [vmem:[%s47 + $0x9c] sm:$0xf]
    %v99 = vld [vmem:[%s47 + $0xa0] sm:$0xf]
    %v100 = vld [vmem:[%s47 + $0xa4] sm:$0xf]
    %v101 = vld [vmem:[%s47 + $0xa8] sm:$0xf]
    %v102 = vld [vmem:[%s47 + $0xac] sm:$0xf]
    %v103 = vld [vmem:[%s47 + $0xb0] sm:$0xf]
    %v104 = vld [vmem:[%s47 + $0xb4] sm:$0xf]
    %v105 = vld [vmem:[%s47 + $0xb8] sm:$0xf]
    %v106 = vld [vmem:[%s47 + $0xbc] sm:$0xf]
    %v107 = vld [vmem:[%s47 + $0xc0] sm:$0xf]
    %v108 = vld [vmem:[%s47 + $0xc4] sm:$0xf]
    %v109 = vld [vmem:[%s47 + $0xc8] sm:$0xf]
    %v110 = vld [vmem:[%s47 + $0xcc] sm:$0xf]
    %v111 = vld [vmem:[%s47 + $0xd0] sm:$0xf]
    %v112 = vld [vmem:[%s47 + $0xd4] sm:$0xf]
    %v113 = vld [vmem:[%s47 + $0xd8] sm:$0xf]
    %v114 = vld [vmem:[%s47 + $0xdc] sm:$0xf]
    %v115 = vld [vmem:[%s47 + $0xe0] sm:$0xf]
    %v116 = vld [vmem:[%s47 + $0xe4] sm:$0xf]
    %v117 = vld [vmem:[%s47 + $0xe8] sm:$0xf]
    %v118 = vld [vmem:[%s47 + $0xec] sm:$0xf]
    %v119 = vld [vmem:[%s47 + $0xf0] sm:$0xf]
    %v120 = vld [vmem:[%s47 + $0xf4] sm:$0xf]
    %v121 = vld [vmem:[%s47 + $0xf8] sm:$0xf]
    %v122 = vld [vmem:[%s47 + $0xfc] sm:$0xf]
    %v123 = vunpack.c.l.bf16 %v59
    %v124 = vunpack.c.l.bf16 %v60
    %v125 = vunpack.c.l.bf16 %v61
    %v126 = vunpack.c.l.bf16 %v62
    %v127 = vunpack.c.l.bf16 %v63
    %v128 = vunpack.c.l.bf16 %v64
    %v129 = vunpack.c.l.bf16 %v65
    %v130 = vunpack.c.l.bf16 %v66
    %v131 = vunpack.c.l.bf16 %v67
    %v132 = vunpack.c.l.bf16 %v68
    %v133 = vunpack.c.l.bf16 %v69
    %v134 = vunpack.c.l.bf16 %v70
    %v135 = vunpack.c.l.bf16 %v71
    %v136 = vunpack.c.l.bf16 %v72
    %v137 = vunpack.c.l.bf16 %v73
    %v138 = vunpack.c.l.bf16 %v74
    %v139 = vunpack.c.l.bf16 %v75
    %v140 = vunpack.c.l.bf16 %v76
    %v141 = vunpack.c.l.bf16 %v77
    %v142 = vunpack.c.l.bf16 %v78
    %v143 = vunpack.c.l.bf16 %v79
    %v144 = vunpack.c.l.bf16 %v80
    %v145 = vunpack.c.l.bf16 %v81
    %v146 = vunpack.c.l.bf16 %v82
    %v147 = vunpack.c.l.bf16 %v83
    %v148 = vunpack.c.l.bf16 %v84
    %v149 = vunpack.c.l.bf16 %v85
    %v150 = vunpack.c.l.bf16 %v86
    %v151 = vunpack.c.l.bf16 %v87
    %v152 = vunpack.c.l.bf16 %v88
    %v153 = vunpack.c.l.bf16 %v89
    %v154 = vunpack.c.l.bf16 %v90
    %v155 = vunpack.c.l.bf16 %v91
    %v156 = vunpack.c.l.bf16 %v92
    %v157 = vunpack.c.l.bf16 %v93
    %v158 = vunpack.c.l.bf16 %v94
    %v159 = vunpack.c.l.bf16 %v95
    %v160 = vunpack.c.l.bf16 %v96
    %v161 = vunpack.c.l.bf16 %v97
    %v162 = vunpack.c.l.bf16 %v98
    %v163 = vunpack.c.l.bf16 %v99
    %v164 = vunpack.c.l.bf16 %v100
    %v165 = vunpack.c.l.bf16 %v101
    %v166 = vunpack.c.l.bf16 %v102
    %v167 = vunpack.c.l.bf16 %v103
    %v168 = vunpack.c.l.bf16 %v104
    %v169 = vunpack.c.l.bf16 %v105
    %v170 = vunpack.c.l.bf16 %v106
    %v171 = vunpack.c.l.bf16 %v107
    %v172 = vunpack.c.l.bf16 %v108
    %v173 = vunpack.c.l.bf16 %v109
    %v174 = vunpack.c.l.bf16 %v110
    %v175 = vunpack.c.l.bf16 %v111
    %v176 = vunpack.c.l.bf16 %v112
    %v177 = vunpack.c.l.bf16 %v113
    %v178 = vunpack.c.l.bf16 %v114
    %v179 = vunpack.c.l.bf16 %v115
    %v180 = vunpack.c.l.bf16 %v116
    %v181 = vunpack.c.l.bf16 %v117
    %v182 = vunpack.c.l.bf16 %v118
    %v183 = vunpack.c.l.bf16 %v119
    %v184 = vunpack.c.l.bf16 %v120
    %v185 = vunpack.c.l.bf16 %v121
    %v186 = vunpack.c.l.bf16 %v122
    %v187 = vld [vmem:[%s1] sm:$0x1]
    %v189 = vlaneseq
    %v190 = vshrl.u32 %v189, 7
    %v191 = vsub.s32 0, %v190
    %v192 = vrot.slane %v187, %v191
    %v194 = vmul.f32 %v123, %v192
    %v195 = vmul.f32 %v124, %v192
    %v196 = vmul.f32 %v125, %v192
    %v197 = vmul.f32 %v126, %v192
    %v198 = vmul.f32 %v127, %v192
    %v199 = vmul.f32 %v128, %v192
    %v200 = vmul.f32 %v129, %v192
    %v201 = vmul.f32 %v130, %v192
    %v202 = vmul.f32 %v131, %v192
    %v203 = vmul.f32 %v132, %v192
    %v204 = vmul.f32 %v133, %v192
    %v205 = vmul.f32 %v134, %v192
    %v206 = vmul.f32 %v135, %v192
    %v207 = vmul.f32 %v136, %v192
    %v208 = vmul.f32 %v137, %v192
    %v209 = vmul.f32 %v138, %v192
    %v210 = vmul.f32 %v139, %v192
    %v211 = vmul.f32 %v140, %v192
    %v212 = vmul.f32 %v141, %v192
    %v213 = vmul.f32 %v142, %v192
    %v214 = vmul.f32 %v143, %v192
    %v215 = vmul.f32 %v144, %v192
    %v216 = vmul.f32 %v145, %v192
    %v217 = vmul.f32 %v146, %v192
    %v218 = vmul.f32 %v147, %v192
    %v219 = vmul.f32 %v148, %v192
    %v220 = vmul.f32 %v149, %v192
    %v221 = vmul.f32 %v150, %v192
    %v222 = vmul.f32 %v151, %v192
    %v223 = vmul.f32 %v152, %v192
    %v224 = vmul.f32 %v153, %v192
    %v225 = vmul.f32 %v154, %v192
    %v226 = vmul.f32 %v155, %v192
    %v227 = vmul.f32 %v156, %v192
    %v228 = vmul.f32 %v157, %v192
    %v229 = vmul.f32 %v158, %v192
    %v230 = vmul.f32 %v159, %v192
    %v231 = vmul.f32 %v160, %v192
    %v232 = vmul.f32 %v161, %v192
    %v233 = vmul.f32 %v162, %v192
    %v234 = vmul.f32 %v163, %v192
    %v235 = vmul.f32 %v164, %v192
    %v236 = vmul.f32 %v165, %v192
    %v237 = vmul.f32 %v166, %v192
    %v238 = vmul.f32 %v167, %v192
    %v239 = vmul.f32 %v168, %v192
    %v240 = vmul.f32 %v169, %v192
    %v241 = vmul.f32 %v170, %v192
    %v242 = vmul.f32 %v171, %v192
    %v243 = vmul.f32 %v172, %v192
    %v244 = vmul.f32 %v173, %v192
    %v245 = vmul.f32 %v174, %v192
    %v246 = vmul.f32 %v175, %v192
    %v247 = vmul.f32 %v176, %v192
    %v248 = vmul.f32 %v177, %v192
    %v249 = vmul.f32 %v178, %v192
    %v250 = vmul.f32 %v179, %v192
    %v251 = vmul.f32 %v180, %v192
    %v252 = vmul.f32 %v181, %v192
    %v253 = vmul.f32 %v182, %v192
    %v254 = vmul.f32 %v183, %v192
    %v255 = vmul.f32 %v184, %v192
    %v256 = vmul.f32 %v185, %v192
    %v257 = vmul.f32 %v186, %v192
    %v258 = vld [vmem:[%s2] sm:$0x1]
    %v260 = vlaneseq
    %v261 = vshrl.u32 %v260, 7
    %v262 = vsub.s32 0, %v261
    %v263 = vrot.slane %v258, %v262
    %v265 = vadd.f32 %v194, %v263
    %v266 = vadd.f32 %v195, %v263
    %v267 = vadd.f32 %v196, %v263
    %v268 = vadd.f32 %v197, %v263
    %v269 = vadd.f32 %v198, %v263
    %v270 = vadd.f32 %v199, %v263
    %v271 = vadd.f32 %v200, %v263
    %v272 = vadd.f32 %v201, %v263
    %v273 = vadd.f32 %v202, %v263
    %v274 = vadd.f32 %v203, %v263
    %v275 = vadd.f32 %v204, %v263
    %v276 = vadd.f32 %v205, %v263
    %v277 = vadd.f32 %v206, %v263
    %v278 = vadd.f32 %v207, %v263
    %v279 = vadd.f32 %v208, %v263
    %v280 = vadd.f32 %v209, %v263
    %v281 = vadd.f32 %v210, %v263
    %v282 = vadd.f32 %v211, %v263
    %v283 = vadd.f32 %v212, %v263
    %v284 = vadd.f32 %v213, %v263
    %v285 = vadd.f32 %v214, %v263
    %v286 = vadd.f32 %v215, %v263
    %v287 = vadd.f32 %v216, %v263
    %v288 = vadd.f32 %v217, %v263
    %v289 = vadd.f32 %v218, %v263
    %v290 = vadd.f32 %v219, %v263
    %v291 = vadd.f32 %v220, %v263
    %v292 = vadd.f32 %v221, %v263
    %v293 = vadd.f32 %v222, %v263
    %v294 = vadd.f32 %v223, %v263
    %v295 = vadd.f32 %v224, %v263
    %v296 = vadd.f32 %v225, %v263
    %v297 = vadd.f32 %v226, %v263
    %v298 = vadd.f32 %v227, %v263
    %v299 = vadd.f32 %v228, %v263
    %v300 = vadd.f32 %v229, %v263
    %v301 = vadd.f32 %v230, %v263
    %v302 = vadd.f32 %v231, %v263
    %v303 = vadd.f32 %v232, %v263
    %v304 = vadd.f32 %v233, %v263
    %v305 = vadd.f32 %v234, %v263
    %v306 = vadd.f32 %v235, %v263
    %v307 = vadd.f32 %v236, %v263
    %v308 = vadd.f32 %v237, %v263
    %v309 = vadd.f32 %v238, %v263
    %v310 = vadd.f32 %v239, %v263
    %v311 = vadd.f32 %v240, %v263
    %v312 = vadd.f32 %v241, %v263
    %v313 = vadd.f32 %v242, %v263
    %v314 = vadd.f32 %v243, %v263
    %v315 = vadd.f32 %v244, %v263
    %v316 = vadd.f32 %v245, %v263
    %v317 = vadd.f32 %v246, %v263
    %v318 = vadd.f32 %v247, %v263
    %v319 = vadd.f32 %v248, %v263
    %v320 = vadd.f32 %v249, %v263
    %v321 = vadd.f32 %v250, %v263
    %v322 = vadd.f32 %v251, %v263
    %v323 = vadd.f32 %v252, %v263
    %v324 = vadd.f32 %v253, %v263
    %v325 = vadd.f32 %v254, %v263
    %v326 = vadd.f32 %v255, %v263
    %v327 = vadd.f32 %v256, %v263
    %v328 = vadd.f32 %v257, %v263
    %v329 = vpack.c.bf16 %v266, %v265
    %v330 = vpack.c.bf16 %v268, %v267
    %v331 = vpack.c.bf16 %v270, %v269
    %v332 = vpack.c.bf16 %v272, %v271
    %v333 = vpack.c.bf16 %v274, %v273
    %v334 = vpack.c.bf16 %v276, %v275
    %v335 = vpack.c.bf16 %v278, %v277
    %v336 = vpack.c.bf16 %v280, %v279
    %v337 = vpack.c.bf16 %v282, %v281
    %v338 = vpack.c.bf16 %v284, %v283
    %v339 = vpack.c.bf16 %v286, %v285
    %v340 = vpack.c.bf16 %v288, %v287
    %v341 = vpack.c.bf16 %v290, %v289
    %v342 = vpack.c.bf16 %v292, %v291
    %v343 = vpack.c.bf16 %v294, %v293
    %v344 = vpack.c.bf16 %v296, %v295
    %v345 = vpack.c.bf16 %v298, %v297
    %v346 = vpack.c.bf16 %v300, %v299
    %v347 = vpack.c.bf16 %v302, %v301
    %v348 = vpack.c.bf16 %v304, %v303
    %v349 = vpack.c.bf16 %v306, %v305
    %v350 = vpack.c.bf16 %v308, %v307
    %v351 = vpack.c.bf16 %v310, %v309
    %v352 = vpack.c.bf16 %v312, %v311
    %v353 = vpack.c.bf16 %v314, %v313
    %v354 = vpack.c.bf16 %v316, %v315
    %v355 = vpack.c.bf16 %v318, %v317
    %v356 = vpack.c.bf16 %v320, %v319
    %v357 = vpack.c.bf16 %v322, %v321
    %v358 = vpack.c.bf16 %v324, %v323
    %v359 = vpack.c.bf16 %v326, %v325
    %v360 = vpack.c.bf16 %v328, %v327
    %v361 = vld [vmem:[%s3] sm:$0xf]
    %v362 = vld [vmem:[%s3 + $0x4] sm:$0xf]
    %v363 = vld [vmem:[%s3 + $0x8] sm:$0xf]
    %v364 = vld [vmem:[%s3 + $0xc] sm:$0x3]
    %v369 = vunpack.c.l.b16 %v361
    %v370 = vunpack.c.l.b16 %v362
    %v371 = vunpack.c.l.b16 %v363
    %v372 = vunpack.c.l.b16 %v364
    %v373 = vpack.c.b16 %v370, %v369
    %v374 = vpack.c.b16 %v372, %v371
    %vm376 = vcmask 220160
    %v378 = vsel %vm376, %v329, 0
    %v381 = vsel %vm376, %v330, 0
    %v384 = vsel %vm376, %v331, 0
    %v387 = vsel %vm376, %v332, 0
    %v390 = vsel %vm376, %v333, 0
    %v393 = vsel %vm376, %v334, 0
    %v396 = vsel %vm376, %v335, 0
    %v399 = vsel %vm376, %v336, 0
    %v402 = vsel %vm376, %v337, 0
    %v405 = vsel %vm376, %v338, 0
    %v408 = vsel %vm376, %v339, 0
    %v411 = vsel %vm376, %v340, 0
    %v414 = vsel %vm376, %v341, 0
    %v417 = vsel %vm376, %v342, 0
    %v420 = vsel %vm376, %v343, 0
    %v423 = vsel %vm376, %v344, 0
    %v426 = vsel %vm376, %v345, 0
    %v429 = vsel %vm376, %v346, 0
    %v432 = vsel %vm376, %v347, 0
    %v435 = vsel %vm376, %v348, 0
    %v438 = vsel %vm376, %v349, 0
    %v441 = vsel %vm376, %v350, 0
    %v444 = vsel %vm376, %v351, 0
    %v447 = vsel %vm376, %v352, 0
    %v450 = vsel %vm376, %v353, 0
    %v453 = vsel %vm376, %v354, 0
    %v456 = vsel %vm376, %v355, 0
    %v459 = vsel %vm376, %v356, 0
    %v462 = vsel %vm376, %v357, 0
    %v465 = vsel %vm376, %v358, 0
    %v468 = vsel %vm376, %v359, 0
    %v471 = vsel %vm376, %v360, 0
    %vm473 = vcmask 1044480
    %vm474 = vcmask 1045504
    %v475 = vsel %vm473, 4294967295, 65535
    %v476 = vsel %vm474, %v475, 0
    %v478 = vand.u32 %v374, %v476
    %480 = vmatprep.subr.bf16.mxu0 0
    %481 = vmatpush1.bf16.msra.mxu0 %v373
    %482 = vmatprep.subr.bf16.mxu0 0
    %483 = vmatpush1.bf16.msra.mxu0 %v478
    %484 = vmatprep.subr.bf16.mxu0 0
    %485 = vmatpush1.bf16.msra.mxu0 0
    %486 = vmatprep.subr.bf16.mxu0 0
    %487 = vmatpush1.bf16.msra.mxu0 0
    %488 = vmatprep.subr.bf16.mxu0 0
    %489 = vmatpush1.bf16.msra.mxu0 0
    %490 = vmatprep.subr.bf16.mxu0 0
    %491 = vmatpush1.bf16.msra.mxu0 0
    %492 = vmatprep.subr.bf16.mxu0 0
    %493 = vmatpush1.bf16.msra.mxu0 0
    %494 = vmatprep.subr.bf16.mxu0 0
    %495 = vmatpush1.bf16.msra.mxu0 0
    %496 = vmatprep.subr.bf16.mxu0 0
    %497 = vmatpush1.bf16.msra.mxu0 0
    %498 = vmatprep.subr.bf16.mxu0 0
    %499 = vmatpush1.bf16.msra.mxu0 0
    %500 = vmatprep.subr.bf16.mxu0 0
    %501 = vmatpush1.bf16.msra.mxu0 0
    %502 = vmatprep.subr.bf16.mxu0 0
    %503 = vmatpush1.bf16.msra.mxu0 0
    %504 = vmatprep.subr.bf16.mxu0 0
    %505 = vmatpush1.bf16.msra.mxu0 0
    %506 = vmatprep.subr.bf16.mxu0 0
    %507 = vmatpush1.bf16.msra.mxu0 0
    %508 = vmatprep.subr.bf16.mxu0 0
    %509 = vmatpush1.bf16.msra.mxu0 0
    %510 = vmatprep.subr.bf16.mxu0 0
    %511 = vmatpush1.bf16.msra.mxu0 0
    %512 = vmatprep.mubr.bf16.mxu0 0
    %513 = vmatmul.mubr.bf16.gmra.mrb[0].mxu0 %v378
    %v514 = vpop.f32.mrb[0].mxu0
    %v515 = vadd.f32 0.0, %v514
    %v516 = vpop.f32.mrb[0].mxu0
    %v517 = vpop.f32.mrb[0].mxu0
    %v518 = vadd.f32 0.0, %v517
    %v519 = vpop.f32.mrb[0].mxu0
    %520 = vmatprep.mubr.bf16.mxu0 0
    %521 = vmatmul.mubr.bf16.gmra.mrb[0].mxu0 %v381
    %v522 = vpop.f32.mrb[0].mxu0
    %v523 = vadd.f32 0.0, %v522
    %v524 = vpop.f32.mrb[0].mxu0
    %v525 = vpop.f32.mrb[0].mxu0
    %v526 = vadd.f32 0.0, %v525
    %v527 = vpop.f32.mrb[0].mxu0
    %528 = vmatprep.mubr.bf16.mxu0 0
    %529 = vmatmul.mubr.bf16.gmra.mrb[0].mxu0 %v384
    %v530 = vpop.f32.mrb[0].mxu0
    %v531 = vadd.f32 0.0, %v530
    %v532 = vpop.f32.mrb[0].mxu0
    %v533 = vpop.f32.mrb[0].mxu0
    %v534 = vadd.f32 0.0, %v533
    %v535 = vpop.f32.mrb[0].mxu0
    %536 = vmatprep.mubr.bf16.mxu0 0
    %537 = vmatmul.mubr.bf16.gmra.mrb[0].mxu0 %v387
    %v538 = vpop.f32.mrb[0].mxu0
    %v539 = vadd.f32 0.0, %v538
    %v540 = vpop.f32.mrb[0].mxu0
    %v541 = vpop.f32.mrb[0].mxu0
    %v542 = vadd.f32 0.0, %v541
    %v543 = vpop.f32.mrb[0].mxu0
    %544 = vmatprep.mubr.bf16.mxu0 0
    %545 = vmatmul.mubr.bf16.gmra.mrb[0].mxu0 %v390
    %v546 = vpop.f32.mrb[0].mxu0
    %v547 = vadd.f32 0.0, %v546
    %v548 = vpop.f32.mrb[0].mxu0
    %v549 = vpop.f32.mrb[0].mxu0
    %v550 = vadd.f32 0.0, %v549
    %v551 = vpop.f32.mrb[0].mxu0
    %552 = vmatprep.mubr.bf16.mxu0 0
    %553 = vmatmul.mubr.bf16.gmra.mrb[0].mxu0 %v393
    %v554 = vpop.f32.mrb[0].mxu0
    %v555 = vadd.f32 0.0, %v554
    %v556 = vpop.f32.mrb[0].mxu0
    %v557 = vpop.f32.mrb[0].mxu0
    %v558 = vadd.f32 0.0, %v557
    %v559 = vpop.f32.mrb[0].mxu0
    %560 = vmatprep.mubr.bf16.mxu0 0
    %561 = vmatmul.mubr.bf16.gmra.mrb[0].mxu0 %v396
    %v562 = vpop.f32.mrb[0].mxu0
    %v563 = vadd.f32 0.0, %v562
    %v564 = vpop.f32.mrb[0].mxu0
    %v565 = vpop.f32.mrb[0].mxu0
    %v566 = vadd.f32 0.0, %v565
    %v567 = vpop.f32.mrb[0].mxu0
    %568 = vmatprep.mubr.bf16.mxu0 0
    %569 = vmatmul.mubr.bf16.gmra.mrb[0].mxu0 %v399
    %v570 = vpop.f32.mrb[0].mxu0
    %v571 = vadd.f32 0.0, %v570
    %v572 = vpop.f32.mrb[0].mxu0
    %v573 = vpop.f32.mrb[0].mxu0
    %v574 = vadd.f32 0.0, %v573
    %v575 = vpop.f32.mrb[0].mxu0
    %576 = vmatprep.mubr.bf16.mxu0 0
    %577 = vmatmul.mubr.bf16.gmra.mrb[0].mxu0 %v402
    %v578 = vpop.f32.mrb[0].mxu0
    %v579 = vadd.f32 0.0, %v578
    %v580 = vpop.f32.mrb[0].mxu0
    %v581 = vpop.f32.mrb[0].mxu0
    %v582 = vadd.f32 0.0, %v581
    %v583 = vpop.f32.mrb[0].mxu0
    %584 = vmatprep.mubr.bf16.mxu0 0
    %585 = vmatmul.mubr.bf16.gmra.mrb[0].mxu0 %v405
    %v586 = vpop.f32.mrb[0].mxu0
    %v587 = vadd.f32 0.0, %v586
    %v588 = vpop.f32.mrb[0].mxu0
    %v589 = vpop.f32.mrb[0].mxu0
    %v590 = vadd.f32 0.0, %v589
    %v591 = vpop.f32.mrb[0].mxu0
    %592 = vmatprep.mubr.bf16.mxu0 0
    %593 = vmatmul.mubr.bf16.gmra.mrb[0].mxu0 %v408
    %v594 = vpop.f32.mrb[0].mxu0
    %v595 = vadd.f32 0.0, %v594
    %v596 = vpop.f32.mrb[0].mxu0
    %v597 = vpop.f32.mrb[0].mxu0
    %v598 = vadd.f32 0.0, %v597
    %v599 = vpop.f32.mrb[0].mxu0
    %600 = vmatprep.mubr.bf16.mxu0 0
    %601 = vmatmul.mubr.bf16.gmra.mrb[0].mxu0 %v411
    %v602 = vpop.f32.mrb[0].mxu0
    %v603 = vadd.f32 0.0, %v602
    %v604 = vpop.f32.mrb[0].mxu0
    %v605 = vpop.f32.mrb[0].mxu0
    %v606 = vadd.f32 0.0, %v605
    %v607 = vpop.f32.mrb[0].mxu0
    %608 = vmatprep.mubr.bf16.mxu0 0
    %609 = vmatmul.mubr.bf16.gmra.mrb[0].mxu0 %v414
    %v610 = vpop.f32.mrb[0].mxu0
    %v611 = vadd.f32 0.0, %v610
    %v612 = vpop.f32.mrb[0].mxu0
    %v613 = vpop.f32.mrb[0].mxu0
    %v614 = vadd.f32 0.0, %v613
    %v615 = vpop.f32.mrb[0].mxu0
    %616 = vmatprep.mubr.bf16.mxu0 0
    %617 = vmatmul.mubr.bf16.gmra.mrb[0].mxu0 %v417
    %v618 = vpop.f32.mrb[0].mxu0
    %v619 = vadd.f32 0.0, %v618
    %v620 = vpop.f32.mrb[0].mxu0
    %v621 = vpop.f32.mrb[0].mxu0
    %v622 = vadd.f32 0.0, %v621
    %v623 = vpop.f32.mrb[0].mxu0
    %624 = vmatprep.mubr.bf16.mxu0 0
    %625 = vmatmul.mubr.bf16.gmra.mrb[0].mxu0 %v420
    %v626 = vpop.f32.mrb[0].mxu0
    %v627 = vadd.f32 0.0, %v626
    %v628 = vpop.f32.mrb[0].mxu0
    %v629 = vpop.f32.mrb[0].mxu0
    %v630 = vadd.f32 0.0, %v629
    %v631 = vpop.f32.mrb[0].mxu0
    %632 = vmatprep.mubr.bf16.mxu0 0
    %633 = vmatmul.mubr.bf16.gmra.mrb[0].mxu0 %v423
    %v634 = vpop.f32.mrb[0].mxu0
    %v635 = vadd.f32 0.0, %v634
    %v636 = vpop.f32.mrb[0].mxu0
    %v637 = vpop.f32.mrb[0].mxu0
    %v638 = vadd.f32 0.0, %v637
    %v639 = vpop.f32.mrb[0].mxu0
    %640 = vmatprep.mubr.bf16.mxu0 0
    %641 = vmatmul.mubr.bf16.gmra.mrb[0].mxu0 %v426
    %v642 = vpop.f32.mrb[0].mxu0
    %v643 = vadd.f32 0.0, %v642
    %v644 = vpop.f32.mrb[0].mxu0
    %v645 = vpop.f32.mrb[0].mxu0
    %v646 = vadd.f32 0.0, %v645
    %v647 = vpop.f32.mrb[0].mxu0
    %648 = vmatprep.mubr.bf16.mxu0 0
    %649 = vmatmul.mubr.bf16.gmra.mrb[0].mxu0 %v429
    %v650 = vpop.f32.mrb[0].mxu0
    %v651 = vadd.f32 0.0, %v650
    %v652 = vpop.f32.mrb[0].mxu0
    %v653 = vpop.f32.mrb[0].mxu0
    %v654 = vadd.f32 0.0, %v653
    %v655 = vpop.f32.mrb[0].mxu0
    %656 = vmatprep.mubr.bf16.mxu0 0
    %657 = vmatmul.mubr.bf16.gmra.mrb[0].mxu0 %v432
    %v658 = vpop.f32.mrb[0].mxu0
    %v659 = vadd.f32 0.0, %v658
    %v660 = vpop.f32.mrb[0].mxu0
    %v661 = vpop.f32.mrb[0].mxu0
    %v662 = vadd.f32 0.0, %v661
    %v663 = vpop.f32.mrb[0].mxu0
    %664 = vmatprep.mubr.bf16.mxu0 0
    %665 = vmatmul.mubr.bf16.gmra.mrb[0].mxu0 %v435
    %v666 = vpop.f32.mrb[0].mxu0
    %v667 = vadd.f32 0.0, %v666
    %v668 = vpop.f32.mrb[0].mxu0
    %v669 = vpop.f32.mrb[0].mxu0
    %v670 = vadd.f32 0.0, %v669
    %v671 = vpop.f32.mrb[0].mxu0
    %672 = vmatprep.mubr.bf16.mxu0 0
    %673 = vmatmul.mubr.bf16.gmra.mrb[0].mxu0 %v438
    %v674 = vpop.f32.mrb[0].mxu0
    %v675 = vadd.f32 0.0, %v674
    %v676 = vpop.f32.mrb[0].mxu0
    %v677 = vpop.f32.mrb[0].mxu0
    %v678 = vadd.f32 0.0, %v677
    %v679 = vpop.f32.mrb[0].mxu0
    %680 = vmatprep.mubr.bf16.mxu0 0
    %681 = vmatmul.mubr.bf16.gmra.mrb[0].mxu0 %v441
    %v682 = vpop.f32.mrb[0].mxu0
    %v683 = vadd.f32 0.0, %v682
    %v684 = vpop.f32.mrb[0].mxu0
    %v685 = vpop.f32.mrb[0].mxu0
    %v686 = vadd.f32 0.0, %v685
    %v687 = vpop.f32.mrb[0].mxu0
    %688 = vmatprep.mubr.bf16.mxu0 0
    %689 = vmatmul.mubr.bf16.gmra.mrb[0].mxu0 %v444
    %v690 = vpop.f32.mrb[0].mxu0
    %v691 = vadd.f32 0.0, %v690
    %v692 = vpop.f32.mrb[0].mxu0
    %v693 = vpop.f32.mrb[0].mxu0
    %v694 = vadd.f32 0.0, %v693
    %v695 = vpop.f32.mrb[0].mxu0
    %696 = vmatprep.mubr.bf16.mxu0 0
    %697 = vmatmul.mubr.bf16.gmra.mrb[0].mxu0 %v447
    %v698 = vpop.f32.mrb[0].mxu0
    %v699 = vadd.f32 0.0, %v698
    %v700 = vpop.f32.mrb[0].mxu0
    %v701 = vpop.f32.mrb[0].mxu0
    %v702 = vadd.f32 0.0, %v701
    %v703 = vpop.f32.mrb[0].mxu0
    %704 = vmatprep.mubr.bf16.mxu0 0
    %705 = vmatmul.mubr.bf16.gmra.mrb[0].mxu0 %v450
    %v706 = vpop.f32.mrb[0].mxu0
    %v707 = vadd.f32 0.0, %v706
    %v708 = vpop.f32.mrb[0].mxu0
    %v709 = vpop.f32.mrb[0].mxu0
    %v710 = vadd.f32 0.0, %v709
    %v711 = vpop.f32.mrb[0].mxu0
    %712 = vmatprep.mubr.bf16.mxu0 0
    %713 = vmatmul.mubr.bf16.gmra.mrb[0].mxu0 %v453
    %v714 = vpop.f32.mrb[0].mxu0
    %v715 = vadd.f32 0.0, %v714
    %v716 = vpop.f32.mrb[0].mxu0
    %v717 = vpop.f32.mrb[0].mxu0
    %v718 = vadd.f32 0.0, %v717
    %v719 = vpop.f32.mrb[0].mxu0
    %720 = vmatprep.mubr.bf16.mxu0 0
    %721 = vmatmul.mubr.bf16.gmra.mrb[0].mxu0 %v456
    %v722 = vpop.f32.mrb[0].mxu0
    %v723 = vadd.f32 0.0, %v722
    %v724 = vpop.f32.mrb[0].mxu0
    %v725 = vpop.f32.mrb[0].mxu0
    %v726 = vadd.f32 0.0, %v725
    %v727 = vpop.f32.mrb[0].mxu0
    %728 = vmatprep.mubr.bf16.mxu0 0
    %729 = vmatmul.mubr.bf16.gmra.mrb[0].mxu0 %v459
    %v730 = vpop.f32.mrb[0].mxu0
    %v731 = vadd.f32 0.0, %v730
    %v732 = vpop.f32.mrb[0].mxu0
    %v733 = vpop.f32.mrb[0].mxu0
    %v734 = vadd.f32 0.0, %v733
    %v735 = vpop.f32.mrb[0].mxu0
    %736 = vmatprep.mubr.bf16.mxu0 0
    %737 = vmatmul.mubr.bf16.gmra.mrb[0].mxu0 %v462
    %v738 = vpop.f32.mrb[0].mxu0
    %v739 = vadd.f32 0.0, %v738
    %v740 = vpop.f32.mrb[0].mxu0
    %v741 = vpop.f32.mrb[0].mxu0
    %v742 = vadd.f32 0.0, %v741
    %v743 = vpop.f32.mrb[0].mxu0
    %744 = vmatprep.mubr.bf16.mxu0 0
    %745 = vmatmul.mubr.bf16.gmra.mrb[0].mxu0 %v465
    %v746 = vpop.f32.mrb[0].mxu0
    %v747 = vadd.f32 0.0, %v746
    %v748 = vpop.f32.mrb[0].mxu0
    %v749 = vpop.f32.mrb[0].mxu0
    %v750 = vadd.f32 0.0, %v749
    %v751 = vpop.f32.mrb[0].mxu0
    %752 = vmatprep.mubr.bf16.mxu0 0
    %753 = vmatmul.mubr.bf16.gmra.mrb[0].mxu0 %v468
    %v754 = vpop.f32.mrb[0].mxu0
    %v755 = vadd.f32 0.0, %v754
    %v756 = vpop.f32.mrb[0].mxu0
    %v757 = vpop.f32.mrb[0].mxu0
    %v758 = vadd.f32 0.0, %v757
    %v759 = vpop.f32.mrb[0].mxu0
    %760 = vmatprep.mubr.bf16.mxu0 0
    %761 = vmatmul.mubr.bf16.gmra.mrb[0].mxu0 %v471
    %v762 = vpop.f32.mrb[0].mxu0
    %v763 = vadd.f32 0.0, %v762
    %v764 = vpop.f32.mrb[0].mxu0
    %v765 = vpop.f32.mrb[0].mxu0
    %v766 = vadd.f32 0.0, %v765
    %v767 = vpop.f32.mrb[0].mxu0
    %768 = vdwg.mxu0
    %v769 = vpack.c.bf16 %v518, %v515
    %v770 = vpack.c.bf16 %v526, %v523
    %v771 = vpack.c.bf16 %v534, %v531
    %v772 = vpack.c.bf16 %v542, %v539
    %v773 = vpack.c.bf16 %v550, %v547
    %v774 = vpack.c.bf16 %v558, %v555
    %v775 = vpack.c.bf16 %v566, %v563
    %v776 = vpack.c.bf16 %v574, %v571
    %v777 = vpack.c.bf16 %v582, %v579
    %v778 = vpack.c.bf16 %v590, %v587
    %v779 = vpack.c.bf16 %v598, %v595
    %v780 = vpack.c.bf16 %v606, %v603
    %v781 = vpack.c.bf16 %v614, %v611
    %v782 = vpack.c.bf16 %v622, %v619
    %v783 = vpack.c.bf16 %v630, %v627
    %v784 = vpack.c.bf16 %v638, %v635
    %v785 = vpack.c.bf16 %v646, %v643
    %v786 = vpack.c.bf16 %v654, %v651
    %v787 = vpack.c.bf16 %v662, %v659
    %v788 = vpack.c.bf16 %v670, %v667
    %v789 = vpack.c.bf16 %v678, %v675
    %v790 = vpack.c.bf16 %v686, %v683
    %v791 = vpack.c.bf16 %v694, %v691
    %v792 = vpack.c.bf16 %v702, %v699
    %v793 = vpack.c.bf16 %v710, %v707
    %v794 = vpack.c.bf16 %v718, %v715
    %v795 = vpack.c.bf16 %v726, %v723
    %v796 = vpack.c.bf16 %v734, %v731
    %v797 = vpack.c.bf16 %v742, %v739
    %v798 = vpack.c.bf16 %v750, %v747
    %v799 = vpack.c.bf16 %v758, %v755
    %v800 = vpack.c.bf16 %v766, %v763
    %v833 = vunpack.c.l.b16 %v769
    %v834 = vunpack.c.h.b16 %v769
    %v835 = vunpack.c.l.b16 %v770
    %v836 = vunpack.c.h.b16 %v770
    %v837 = vunpack.c.l.b16 %v771
    %v838 = vunpack.c.h.b16 %v771
    %v839 = vunpack.c.l.b16 %v772
    %v840 = vunpack.c.h.b16 %v772
    %v841 = vunpack.c.l.b16 %v773
    %v842 = vunpack.c.h.b16 %v773
    %v843 = vunpack.c.l.b16 %v774
    %v844 = vunpack.c.h.b16 %v774
    %v845 = vunpack.c.l.b16 %v775
    %v846 = vunpack.c.h.b16 %v775
    %v847 = vunpack.c.l.b16 %v776
    %v848 = vunpack.c.h.b16 %v776
    %v849 = vunpack.c.l.b16 %v777
    %v850 = vunpack.c.h.b16 %v777
    %v851 = vunpack.c.l.b16 %v778
    %v852 = vunpack.c.h.b16 %v778
    %v853 = vunpack.c.l.b16 %v779
    %v854 = vunpack.c.h.b16 %v779
    %v855 = vunpack.c.l.b16 %v780
    %v856 = vunpack.c.h.b16 %v780
    %v857 = vunpack.c.l.b16 %v781
    %v858 = vunpack.c.h.b16 %v781
    %v859 = vunpack.c.l.b16 %v782
    %v860 = vunpack.c.h.b16 %v782
    %v861 = vunpack.c.l.b16 %v783
    %v862 = vunpack.c.h.b16 %v783
    %v863 = vunpack.c.l.b16 %v784
    %v864 = vunpack.c.h.b16 %v784
    %v865 = vunpack.c.l.b16 %v785
    %v866 = vunpack.c.h.b16 %v785
    %v867 = vunpack.c.l.b16 %v786
    %v868 = vunpack.c.h.b16 %v786
    %v869 = vunpack.c.l.b16 %v787
    %v870 = vunpack.c.h.b16 %v787
    %v871 = vunpack.c.l.b16 %v788
    %v872 = vunpack.c.h.b16 %v788
    %v873 = vunpack.c.l.b16 %v789
    %v874 = vunpack.c.h.b16 %v789
    %v875 = vunpack.c.l.b16 %v790
    %v876 = vunpack.c.h.b16 %v790
    %v877 = vunpack.c.l.b16 %v791
    %v878 = vunpack.c.h.b16 %v791
    %v879 = vunpack.c.l.b16 %v792
    %v880 = vunpack.c.h.b16 %v792
    %v881 = vunpack.c.l.b16 %v793
    %v882 = vunpack.c.h.b16 %v793
    %v883 = vunpack.c.l.b16 %v794
    %v884 = vunpack.c.h.b16 %v794
    %v885 = vunpack.c.l.b16 %v795
    %v886 = vunpack.c.h.b16 %v795
    %v887 = vunpack.c.l.b16 %v796
    %v888 = vunpack.c.h.b16 %v796
    %v889 = vunpack.c.l.b16 %v797
    %v890 = vunpack.c.h.b16 %v797
    %v891 = vunpack.c.l.b16 %v798
    %v892 = vunpack.c.h.b16 %v798
    %v893 = vunpack.c.l.b16 %v799
    %v894 = vunpack.c.h.b16 %v799
    %v895 = vunpack.c.l.b16 %v800
    %v896 = vunpack.c.h.b16 %v800
    %v897 = vpack.c.b16 %v833, %v833
    %v898 = vpack.c.b16 %v834, %v834
    %v899 = vpack.c.b16 %v835, %v835
    %v900 = vpack.c.b16 %v836, %v836
    %v901 = vpack.c.b16 %v837, %v837
    %v902 = vpack.c.b16 %v838, %v838
    %v903 = vpack.c.b16 %v839, %v839
    %v904 = vpack.c.b16 %v840, %v840
    %v905 = vpack.c.b16 %v841, %v841
    %v906 = vpack.c.b16 %v842, %v842
    %v907 = vpack.c.b16 %v843, %v843
    %v908 = vpack.c.b16 %v844, %v844
    %v909 = vpack.c.b16 %v845, %v845
    %v910 = vpack.c.b16 %v846, %v846
    %v911 = vpack.c.b16 %v847, %v847
    %v912 = vpack.c.b16 %v848, %v848
    %v913 = vpack.c.b16 %v849, %v849
    %v914 = vpack.c.b16 %v850, %v850
    %v915 = vpack.c.b16 %v851, %v851
    %v916 = vpack.c.b16 %v852, %v852
    %v917 = vpack.c.b16 %v853, %v853
    %v918 = vpack.c.b16 %v854, %v854
    %v919 = vpack.c.b16 %v855, %v855
    %v920 = vpack.c.b16 %v856, %v856
    %v921 = vpack.c.b16 %v857, %v857
    %v922 = vpack.c.b16 %v858, %v858
    %v923 = vpack.c.b16 %v859, %v859
    %v924 = vpack.c.b16 %v860, %v860
    %v925 = vpack.c.b16 %v861, %v861
    %v926 = vpack.c.b16 %v862, %v862
    %v927 = vpack.c.b16 %v863, %v863
    %v928 = vpack.c.b16 %v864, %v864
    %v929 = vpack.c.b16 %v865, %v865
    %v930 = vpack.c.b16 %v866, %v866
    %v931 = vpack.c.b16 %v867, %v867
    %v932 = vpack.c.b16 %v868, %v868
    %v933 = vpack.c.b16 %v869, %v869
    %v934 = vpack.c.b16 %v870, %v870
    %v935 = vpack.c.b16 %v871, %v871
    %v936 = vpack.c.b16 %v872, %v872
    %v937 = vpack.c.b16 %v873, %v873
    %v938 = vpack.c.b16 %v874, %v874
    %v939 = vpack.c.b16 %v875, %v875
    %v940 = vpack.c.b16 %v876, %v876
    %v941 = vpack.c.b16 %v877, %v877
    %v942 = vpack.c.b16 %v878, %v878
    %v943 = vpack.c.b16 %v879, %v879
    %v944 = vpack.c.b16 %v880, %v880
    %v945 = vpack.c.b16 %v881, %v881
    %v946 = vpack.c.b16 %v882, %v882
    %v947 = vpack.c.b16 %v883, %v883
    %v948 = vpack.c.b16 %v884, %v884
    %v949 = vpack.c.b16 %v885, %v885
    %v950 = vpack.c.b16 %v886, %v886
    %v951 = vpack.c.b16 %v887, %v887
    %v952 = vpack.c.b16 %v888, %v888
    %v953 = vpack.c.b16 %v889, %v889
    %v954 = vpack.c.b16 %v890, %v890
    %v955 = vpack.c.b16 %v891, %v891
    %v956 = vpack.c.b16 %v892, %v892
    %v957 = vpack.c.b16 %v893, %v893
    %v958 = vpack.c.b16 %v894, %v894
    %v959 = vpack.c.b16 %v895, %v895
    %v960 = vpack.c.b16 %v896, %v896
    %vm1025 = vcmask 60416
    %1026 = vst.msk [vmem:[%s55] sm:$0xf] %vm1025, %v897
    %1027 = vst.msk [vmem:[%s55 + $0x4] sm:$0xf] %vm1025, %v898
    %1028 = vst.msk [vmem:[%s55 + $0x8] sm:$0xf] %vm1025, %v899
    %1029 = vst.msk [vmem:[%s55 + $0xc] sm:$0xf] %vm1025, %v900
    %1030 = vst.msk [vmem:[%s55 + $0x10] sm:$0xf] %vm1025, %v901
    %1031 = vst.msk [vmem:[%s55 + $0x14] sm:$0xf] %vm1025, %v902
    %1032 = vst.msk [vmem:[%s55 + $0x18] sm:$0xf] %vm1025, %v903
    %1033 = vst.msk [vmem:[%s55 + $0x1c] sm:$0xf] %vm1025, %v904
    %1034 = vst.msk [vmem:[%s55 + $0x20] sm:$0xf] %vm1025, %v905
    %1035 = vst.msk [vmem:[%s55 + $0x24] sm:$0xf] %vm1025, %v906
    %1036 = vst.msk [vmem:[%s55 + $0x28] sm:$0xf] %vm1025, %v907
    %1037 = vst.msk [vmem:[%s55 + $0x2c] sm:$0xf] %vm1025, %v908
    %1038 = vst.msk [vmem:[%s55 + $0x30] sm:$0xf] %vm1025, %v909
    %1039 = vst.msk [vmem:[%s55 + $0x34] sm:$0xf] %vm1025, %v910
    %1040 = vst.msk [vmem:[%s55 + $0x38] sm:$0xf] %vm1025, %v911
    %1041 = vst.msk [vmem:[%s55 + $0x3c] sm:$0xf] %vm1025, %v912
    %1042 = vst.msk [vmem:[%s55 + $0x40] sm:$0xf] %vm1025, %v913
    %1043 = vst.msk [vmem:[%s55 + $0x44] sm:$0xf] %vm1025, %v914
    %1044 = vst.msk [vmem:[%s55 + $0x48] sm:$0xf] %vm1025, %v915
    %1045 = vst.msk [vmem:[%s55 + $0x4c] sm:$0xf] %vm1025, %v916
    %1046 = vst.msk [vmem:[%s55 + $0x50] sm:$0xf] %vm1025, %v917
    %1047 = vst.msk [vmem:[%s55 + $0x54] sm:$0xf] %vm1025, %v918
    %1048 = vst.msk [vmem:[%s55 + $0x58] sm:$0xf] %vm1025, %v919
    %1049 = vst.msk [vmem:[%s55 + $0x5c] sm:$0xf] %vm1025, %v920
    %1050 = vst.msk [vmem:[%s55 + $0x60] sm:$0xf] %vm1025, %v921
    %1051 = vst.msk [vmem:[%s55 + $0x64] sm:$0xf] %vm1025, %v922
    %1052 = vst.msk [vmem:[%s55 + $0x68] sm:$0xf] %vm1025, %v923
    %1053 = vst.msk [vmem:[%s55 + $0x6c] sm:$0xf] %vm1025, %v924
    %1054 = vst.msk [vmem:[%s55 + $0x70] sm:$0xf] %vm1025, %v925
    %1055 = vst.msk [vmem:[%s55 + $0x74] sm:$0xf] %vm1025, %v926
    %1056 = vst.msk [vmem:[%s55 + $0x78] sm:$0xf] %vm1025, %v927
    %1057 = vst.msk [vmem:[%s55 + $0x7c] sm:$0xf] %vm1025, %v928
    %1058 = vst.msk [vmem:[%s55 + $0x80] sm:$0xf] %vm1025, %v929
    %1059 = vst.msk [vmem:[%s55 + $0x84] sm:$0xf] %vm1025, %v930
    %1060 = vst.msk [vmem:[%s55 + $0x88] sm:$0xf] %vm1025, %v931
    %1061 = vst.msk [vmem:[%s55 + $0x8c] sm:$0xf] %vm1025, %v932
    %1062 = vst.msk [vmem:[%s55 + $0x90] sm:$0xf] %vm1025, %v933
    %1063 = vst.msk [vmem:[%s55 + $0x94] sm:$0xf] %vm1025, %v934
    %1064 = vst.msk [vmem:[%s55 + $0x98] sm:$0xf] %vm1025, %v935
    %1065 = vst.msk [vmem:[%s55 + $0x9c] sm:$0xf] %vm1025, %v936
    %1066 = vst.msk [vmem:[%s55 + $0xa0] sm:$0xf] %vm1025, %v937
    %1067 = vst.msk [vmem:[%s55 + $0xa4] sm:$0xf] %vm1025, %v938
    %1068 = vst.msk [vmem:[%s55 + $0xa8] sm:$0xf] %vm1025, %v939
    %1069 = vst.msk [vmem:[%s55 + $0xac] sm:$0xf] %vm1025, %v940
    %1070 = vst.msk [vmem:[%s55 + $0xb0] sm:$0xf] %vm1025, %v941
    %1071 = vst.msk [vmem:[%s55 + $0xb4] sm:$0xf] %vm1025, %v942
    %1072 = vst.msk [vmem:[%s55 + $0xb8] sm:$0xf] %vm1025, %v943
    %1073 = vst.msk [vmem:[%s55 + $0xbc] sm:$0xf] %vm1025, %v944
    %1074 = vst.msk [vmem:[%s55 + $0xc0] sm:$0xf] %vm1025, %v945
    %1075 = vst.msk [vmem:[%s55 + $0xc4] sm:$0xf] %vm1025, %v946
    %1076 = vst.msk [vmem:[%s55 + $0xc8] sm:$0xf] %vm1025, %v947
    %1077 = vst.msk [vmem:[%s55 + $0xcc] sm:$0xf] %vm1025, %v948
    %1078 = vst.msk [vmem:[%s55 + $0xd0] sm:$0xf] %vm1025, %v949
    %1079 = vst.msk [vmem:[%s55 + $0xd4] sm:$0xf] %vm1025, %v950
    %1080 = vst.msk [vmem:[%s55 + $0xd8] sm:$0xf] %vm1025, %v951
    %1081 = vst.msk [vmem:[%s55 + $0xdc] sm:$0xf] %vm1025, %v952
    %1082 = vst.msk [vmem:[%s55 + $0xe0] sm:$0xf] %vm1025, %v953
    %1083 = vst.msk [vmem:[%s55 + $0xe4] sm:$0xf] %vm1025, %v954
    %1084 = vst.msk [vmem:[%s55 + $0xe8] sm:$0xf] %vm1025, %v955
    %1085 = vst.msk [vmem:[%s55 + $0xec] sm:$0xf] %vm1025, %v956
    %1086 = vst.msk [vmem:[%s55 + $0xf0] sm:$0xf] %vm1025, %v957
    %1087 = vst.msk [vmem:[%s55 + $0xf4] sm:$0xf] %vm1025, %v958
    %1088 = vst.msk [vmem:[%s55 + $0xf8] sm:$0xf] %vm1025, %v959
    %1089 = vst.msk [vmem:[%s55 + $0xfc] sm:$0xf] %vm1025, %v960
    %p1090 = scmp.eq.s32.totalorder 0, 0
    // Predicated region
    $region18: #{tpu_custom_call.1} parent=1 // pred_check
      %p1091 = pneg %p1090
    $region19: #{tpu_custom_call.1} parent=1 // pred_check_branch
      %1093 = sbr.rel (%p1091) target = $region21
    $region20: #{tpu_custom_call.1} parent=1 // pred_region
      %vm1094 = vcmask 57344
      %1095 = vst.msk [vmem:[#allocation2] sm:$0x1] %vm1094, 0.0
      %1096 = vst.msk [vmem:[#allocation4] sm:$0x1] %vm1094, 0.0
    $region21: #{tpu_custom_call.1} parent=1 // pred_fallthru
      _
    %v1097 = vld [vmem:[#allocation2] sm:$0x1]
    %vm1098 = vcmask 64512
    %v1099 = vsel %vm1098, %v515, 0.0
    %v1100 = vsel %vm1098, %v518, 0.0
    %v1101 = vadd.f32 %v1099, %v1100
    %v1102 = vsel %vm1098, %v523, 0.0
    %v1103 = vadd.f32 %v1101, %v1102
    %v1104 = vsel %vm1098, %v526, 0.0
    %v1105 = vadd.f32 %v1103, %v1104
    %v1106 = vsel %vm1098, %v531, 0.0
    %v1107 = vadd.f32 %v1105, %v1106
    %v1108 = vsel %vm1098, %v534, 0.0
    %v1109 = vadd.f32 %v1107, %v1108
    %v1110 = vsel %vm1098, %v539, 0.0
    %v1111 = vadd.f32 %v1109, %v1110
    %v1112 = vsel %vm1098, %v542, 0.0
    %v1113 = vadd.f32 %v1111, %v1112
    %v1114 = vsel %vm1098, %v547, 0.0
    %v1115 = vadd.f32 %v1113, %v1114
    %v1116 = vsel %vm1098, %v550, 0.0
    %v1117 = vadd.f32 %v1115, %v1116
    %v1118 = vsel %vm1098, %v555, 0.0
    %v1119 = vadd.f32 %v1117, %v1118
    %v1120 = vsel %vm1098, %v558, 0.0
    %v1121 = vadd.f32 %v1119, %v1120
    %v1122 = vsel %vm1098, %v563, 0.0
    %v1123 = vadd.f32 %v1121, %v1122
    %v1124 = vsel %vm1098, %v566, 0.0
    %v1125 = vadd.f32 %v1123, %v1124
    %v1126 = vsel %vm1098, %v571, 0.0
    %v1127 = vadd.f32 %v1125, %v1126
    %v1128 = vsel %vm1098, %v574, 0.0
    %v1129 = vadd.f32 %v1127, %v1128
    %v1130 = vsel %vm1098, %v579, 0.0
    %v1131 = vadd.f32 %v1129, %v1130
    %v1132 = vsel %vm1098, %v582, 0.0
    %v1133 = vadd.f32 %v1131, %v1132
    %v1134 = vsel %vm1098, %v587, 0.0
    %v1135 = vadd.f32 %v1133, %v1134
    %v1136 = vsel %vm1098, %v590, 0.0
    %v1137 = vadd.f32 %v1135, %v1136
    %v1138 = vsel %vm1098, %v595, 0.0
    %v1139 = vadd.f32 %v1137, %v1138
    %v1140 = vsel %vm1098, %v598, 0.0
    %v1141 = vadd.f32 %v1139, %v1140
    %v1142 = vsel %vm1098, %v603, 0.0
    %v1143 = vadd.f32 %v1141, %v1142
    %v1144 = vsel %vm1098, %v606, 0.0
    %v1145 = vadd.f32 %v1143, %v1144
    %v1146 = vsel %vm1098, %v611, 0.0
    %v1147 = vadd.f32 %v1145, %v1146
    %v1148 = vsel %vm1098, %v614, 0.0
    %v1149 = vadd.f32 %v1147, %v1148
    %v1150 = vsel %vm1098, %v619, 0.0
    %v1151 = vadd.f32 %v1149, %v1150
    %v1152 = vsel %vm1098, %v622, 0.0
    %v1153 = vadd.f32 %v1151, %v1152
    %v1154 = vsel %vm1098, %v627, 0.0
    %v1155 = vadd.f32 %v1153, %v1154
    %v1156 = vsel %vm1098, %v630, 0.0
    %v1157 = vadd.f32 %v1155, %v1156
    %v1158 = vsel %vm1098, %v635, 0.0
    %v1159 = vadd.f32 %v1157, %v1158
    %v1160 = vsel %vm1098, %v638, 0.0
    %v1161 = vadd.f32 %v1159, %v1160
    %v1162 = vsel %vm1098, %v643, 0.0
    %v1163 = vadd.f32 %v1161, %v1162
    %v1164 = vsel %vm1098, %v646, 0.0
    %v1165 = vadd.f32 %v1163, %v1164
    %v1166 = vsel %vm1098, %v651, 0.0
    %v1167 = vadd.f32 %v1165, %v1166
    %v1168 = vsel %vm1098, %v654, 0.0
    %v1169 = vadd.f32 %v1167, %v1168
    %v1170 = vsel %vm1098, %v659, 0.0
    %v1171 = vadd.f32 %v1169, %v1170
    %v1172 = vsel %vm1098, %v662, 0.0
    %v1173 = vadd.f32 %v1171, %v1172
    %v1174 = vsel %vm1098, %v667, 0.0
    %v1175 = vadd.f32 %v1173, %v1174
    %v1176 = vsel %vm1098, %v670, 0.0
    %v1177 = vadd.f32 %v1175, %v1176
    %v1178 = vsel %vm1098, %v675, 0.0
    %v1179 = vadd.f32 %v1177, %v1178
    %v1180 = vsel %vm1098, %v678, 0.0
    %v1181 = vadd.f32 %v1179, %v1180
    %v1182 = vsel %vm1098, %v683, 0.0
    %v1183 = vadd.f32 %v1181, %v1182
    %v1184 = vsel %vm1098, %v686, 0.0
    %v1185 = vadd.f32 %v1183, %v1184
    %v1186 = vsel %vm1098, %v691, 0.0
    %v1187 = vadd.f32 %v1185, %v1186
    %v1188 = vsel %vm1098, %v694, 0.0
    %v1189 = vadd.f32 %v1187, %v1188
    %v1190 = vsel %vm1098, %v699, 0.0
    %v1191 = vadd.f32 %v1189, %v1190
    %v1192 = vsel %vm1098, %v702, 0.0
    %v1193 = vadd.f32 %v1191, %v1192
    %v1194 = vsel %vm1098, %v707, 0.0
    %v1195 = vadd.f32 %v1193, %v1194
    %v1196 = vsel %vm1098, %v710, 0.0
    %v1197 = vadd.f32 %v1195, %v1196
    %v1198 = vsel %vm1098, %v715, 0.0
    %v1199 = vadd.f32 %v1197, %v1198
    %v1200 = vsel %vm1098, %v718, 0.0
    %v1201 = vadd.f32 %v1199, %v1200
    %v1202 = vsel %vm1098, %v723, 0.0
    %v1203 = vadd.f32 %v1201, %v1202
    %v1204 = vsel %vm1098, %v726, 0.0
    %v1205 = vadd.f32 %v1203, %v1204
    %v1206 = vsel %vm1098, %v731, 0.0
    %v1207 = vadd.f32 %v1205, %v1206
    %v1208 = vsel %vm1098, %v734, 0.0
    %v1209 = vadd.f32 %v1207, %v1208
    %v1210 = vsel %vm1098, %v739, 0.0
    %v1211 = vadd.f32 %v1209, %v1210
    %v1212 = vsel %vm1098, %v742, 0.0
    %v1213 = vadd.f32 %v1211, %v1212
    %v1214 = vsel %vm1098, %v747, 0.0
    %v1215 = vadd.f32 %v1213, %v1214
    %v1216 = vsel %vm1098, %v750, 0.0
    %v1217 = vadd.f32 %v1215, %v1216
    %v1218 = vsel %vm1098, %v755, 0.0
    %v1219 = vadd.f32 %v1217, %v1218
    %v1220 = vsel %vm1098, %v758, 0.0
    %v1221 = vadd.f32 %v1219, %v1220
    %v1222 = vsel %vm1098, %v763, 0.0
    %v1223 = vadd.f32 %v1221, %v1222
    %v1224 = vsel %vm1098, %v766, 0.0
    %v1225 = vadd.f32 %v1223, %v1224
    %v1226 = vrot.slane %v1225, 4
    %v1227 = vadd.f32 %v1225, %v1226
    %v1228 = vrot.slane %v1227, 2
    %v1229 = vadd.f32 %v1227, %v1228
    %v1230 = vrot.slane %v1229, 1
    %v1231 = vadd.f32 %v1229, %v1230
    %v1232 = vadd.f32 %v1097, %v1231
    %vm1233 = vcmask 57344
    %1234 = vst.msk [vmem:[#allocation2] sm:$0x1] %vm1233, %v1232
    %v1235 = vld [vmem:[#allocation4] sm:$0x1]
    %v1236 = vmul.f32 %v515, %v515
    %v1237 = vmul.f32 %v518, %v518
    %v1238 = vmul.f32 %v523, %v523
    %v1239 = vmul.f32 %v526, %v526
    %v1240 = vmul.f32 %v531, %v531
    %v1241 = vmul.f32 %v534, %v534
    %v1242 = vmul.f32 %v539, %v539
    %v1243 = vmul.f32 %v542, %v542
    %v1244 = vmul.f32 %v547, %v547
    %v1245 = vmul.f32 %v550, %v550
    %v1246 = vmul.f32 %v555, %v555
    %v1247 = vmul.f32 %v558, %v558
    %v1248 = vmul.f32 %v563, %v563
    %v1249 = vmul.f32 %v566, %v566
    %v1250 = vmul.f32 %v571, %v571
    %v1251 = vmul.f32 %v574, %v574
    %v1252 = vmul.f32 %v579, %v579
    %v1253 = vmul.f32 %v582, %v582
    %v1254 = vmul.f32 %v587, %v587
    %v1255 = vmul.f32 %v590, %v590
    %v1256 = vmul.f32 %v595, %v595
    %v1257 = vmul.f32 %v598, %v598
    %v1258 = vmul.f32 %v603, %v603
    %v1259 = vmul.f32 %v606, %v606
    %v1260 = vmul.f32 %v611, %v611
    %v1261 = vmul.f32 %v614, %v614
    %v1262 = vmul.f32 %v619, %v619
    %v1263 = vmul.f32 %v622, %v622
    %v1264 = vmul.f32 %v627, %v627
    %v1265 = vmul.f32 %v630, %v630
    %v1266 = vmul.f32 %v635, %v635
    %v1267 = vmul.f32 %v638, %v638
    %v1268 = vmul.f32 %v643, %v643
    %v1269 = vmul.f32 %v646, %v646
    %v1270 = vmul.f32 %v651, %v651
    %v1271 = vmul.f32 %v654, %v654
    %v1272 = vmul.f32 %v659, %v659
    %v1273 = vmul.f32 %v662, %v662
    %v1274 = vmul.f32 %v667, %v667
    %v1275 = vmul.f32 %v670, %v670
    %v1276 = vmul.f32 %v675, %v675
    %v1277 = vmul.f32 %v678, %v678
    %v1278 = vmul.f32 %v683, %v683
    %v1279 = vmul.f32 %v686, %v686
    %v1280 = vmul.f32 %v691, %v691
    %v1281 = vmul.f32 %v694, %v694
    %v1282 = vmul.f32 %v699, %v699
    %v1283 = vmul.f32 %v702, %v702
    %v1284 = vmul.f32 %v707, %v707
    %v1285 = vmul.f32 %v710, %v710
    %v1286 = vmul.f32 %v715, %v715
    %v1287 = vmul.f32 %v718, %v718
    %v1288 = vmul.f32 %v723, %v723
    %v1289 = vmul.f32 %v726, %v726
    %v1290 = vmul.f32 %v731, %v731
    %v1291 = vmul.f32 %v734, %v734
    %v1292 = vmul.f32 %v739, %v739
    %v1293 = vmul.f32 %v742, %v742
    %v1294 = vmul.f32 %v747, %v747
    %v1295 = vmul.f32 %v750, %v750
    %v1296 = vmul.f32 %v755, %v755
    %v1297 = vmul.f32 %v758, %v758
    %v1298 = vmul.f32 %v763, %v763
    %v1299 = vmul.f32 %v766, %v766
    %v1300 = vsel %vm1098, %v1236, 0.0
    %v1301 = vsel %vm1098, %v1237, 0.0
    %v1302 = vadd.f32 %v1300, %v1301
    %v1303 = vsel %vm1098, %v1238, 0.0
    %v1304 = vadd.f32 %v1302, %v1303
    %v1305 = vsel %vm1098, %v1239, 0.0
    %v1306 = vadd.f32 %v1304, %v1305
    %v1307 = vsel %vm1098, %v1240, 0.0
    %v1308 = vadd.f32 %v1306, %v1307
    %v1309 = vsel %vm1098, %v1241, 0.0
    %v1310 = vadd.f32 %v1308, %v1309
    %v1311 = vsel %vm1098, %v1242, 0.0
    %v1312 = vadd.f32 %v1310, %v1311
    %v1313 = vsel %vm1098, %v1243, 0.0
    %v1314 = vadd.f32 %v1312, %v1313
    %v1315 = vsel %vm1098, %v1244, 0.0
    %v1316 = vadd.f32 %v1314, %v1315
    %v1317 = vsel %vm1098, %v1245, 0.0
    %v1318 = vadd.f32 %v1316, %v1317
    %v1319 = vsel %vm1098, %v1246, 0.0
    %v1320 = vadd.f32 %v1318, %v1319
    %v1321 = vsel %vm1098, %v1247, 0.0
    %v1322 = vadd.f32 %v1320, %v1321
    %v1323 = vsel %vm1098, %v1248, 0.0
    %v1324 = vadd.f32 %v1322, %v1323
    %v1325 = vsel %vm1098, %v1249, 0.0
    %v1326 = vadd.f32 %v1324, %v1325
    %v1327 = vsel %vm1098, %v1250, 0.0
    %v1328 = vadd.f32 %v1326, %v1327
    %v1329 = vsel %vm1098, %v1251, 0.0
    %v1330 = vadd.f32 %v1328, %v1329
    %v1331 = vsel %vm1098, %v1252, 0.0
    %v1332 = vadd.f32 %v1330, %v1331
    %v1333 = vsel %vm1098, %v1253, 0.0
    %v1334 = vadd.f32 %v1332, %v1333
    %v1335 = vsel %vm1098, %v1254, 0.0
    %v1336 = vadd.f32 %v1334, %v1335
    %v1337 = vsel %vm1098, %v1255, 0.0
    %v1338 = vadd.f32 %v1336, %v1337
    %v1339 = vsel %vm1098, %v1256, 0.0
    %v1340 = vadd.f32 %v1338, %v1339
    %v1341 = vsel %vm1098, %v1257, 0.0
    %v1342 = vadd.f32 %v1340, %v1341
    %v1343 = vsel %vm1098, %v1258, 0.0
    %v1344 = vadd.f32 %v1342, %v1343
    %v1345 = vsel %vm1098, %v1259, 0.0
    %v1346 = vadd.f32 %v1344, %v1345
    %v1347 = vsel %vm1098, %v1260, 0.0
    %v1348 = vadd.f32 %v1346, %v1347
    %v1349 = vsel %vm1098, %v1261, 0.0
    %v1350 = vadd.f32 %v1348, %v1349
    %v1351 = vsel %vm1098, %v1262, 0.0
    %v1352 = vadd.f32 %v1350, %v1351
    %v1353 = vsel %vm1098, %v1263, 0.0
    %v1354 = vadd.f32 %v1352, %v1353
    %v1355 = vsel %vm1098, %v1264, 0.0
    %v1356 = vadd.f32 %v1354, %v1355
    %v1357 = vsel %vm1098, %v1265, 0.0
    %v1358 = vadd.f32 %v1356, %v1357
    %v1359 = vsel %vm1098, %v1266, 0.0
    %v1360 = vadd.f32 %v1358, %v1359
    %v1361 = vsel %vm1098, %v1267, 0.0
    %v1362 = vadd.f32 %v1360, %v1361
    %v1363 = vsel %vm1098, %v1268, 0.0
    %v1364 = vadd.f32 %v1362, %v1363
    %v1365 = vsel %vm1098, %v1269, 0.0
    %v1366 = vadd.f32 %v1364, %v1365
    %v1367 = vsel %vm1098, %v1270, 0.0
    %v1368 = vadd.f32 %v1366, %v1367
    %v1369 = vsel %vm1098, %v1271, 0.0
    %v1370 = vadd.f32 %v1368, %v1369
    %v1371 = vsel %vm1098, %v1272, 0.0
    %v1372 = vadd.f32 %v1370, %v1371
    %v1373 = vsel %vm1098, %v1273, 0.0
    %v1374 = vadd.f32 %v1372, %v1373
    %v1375 = vsel %vm1098, %v1274, 0.0
    %v1376 = vadd.f32 %v1374, %v1375
    %v1377 = vsel %vm1098, %v1275, 0.0
    %v1378 = vadd.f32 %v1376, %v1377
    %v1379 = vsel %vm1098, %v1276, 0.0
    %v1380 = vadd.f32 %v1378, %v1379
    %v1381 = vsel %vm1098, %v1277, 0.0
    %v1382 = vadd.f32 %v1380, %v1381
    %v1383 = vsel %vm1098, %v1278, 0.0
    %v1384 = vadd.f32 %v1382, %v1383
    %v1385 = vsel %vm1098, %v1279, 0.0
    %v1386 = vadd.f32 %v1384, %v1385
    %v1387 = vsel %vm1098, %v1280, 0.0
    %v1388 = vadd.f32 %v1386, %v1387
    %v1389 = vsel %vm1098, %v1281, 0.0
    %v1390 = vadd.f32 %v1388, %v1389
    %v1391 = vsel %vm1098, %v1282, 0.0
    %v1392 = vadd.f32 %v1390, %v1391
    %v1393 = vsel %vm1098, %v1283, 0.0
    %v1394 = vadd.f32 %v1392, %v1393
    %v1395 = vsel %vm1098, %v1284, 0.0
    %v1396 = vadd.f32 %v1394, %v1395
    %v1397 = vsel %vm1098, %v1285, 0.0
    %v1398 = vadd.f32 %v1396, %v1397
    %v1399 = vsel %vm1098, %v1286, 0.0
    %v1400 = vadd.f32 %v1398, %v1399
    %v1401 = vsel %vm1098, %v1287, 0.0
    %v1402 = vadd.f32 %v1400, %v1401
    %v1403 = vsel %vm1098, %v1288, 0.0
    %v1404 = vadd.f32 %v1402, %v1403
    %v1405 = vsel %vm1098, %v1289, 0.0
    %v1406 = vadd.f32 %v1404, %v1405
    %v1407 = vsel %vm1098, %v1290, 0.0
    %v1408 = vadd.f32 %v1406, %v1407
    %v1409 = vsel %vm1098, %v1291, 0.0
    %v1410 = vadd.f32 %v1408, %v1409
    %v1411 = vsel %vm1098, %v1292, 0.0
    %v1412 = vadd.f32 %v1410, %v1411
    %v1413 = vsel %vm1098, %v1293, 0.0
    %v1414 = vadd.f32 %v1412, %v1413
    %v1415 = vsel %vm1098, %v1294, 0.0
    %v1416 = vadd.f32 %v1414, %v1415
    %v1417 = vsel %vm1098, %v1295, 0.0
    %v1418 = vadd.f32 %v1416, %v1417
    %v1419 = vsel %vm1098, %v1296, 0.0
    %v1420 = vadd.f32 %v1418, %v1419
    %v1421 = vsel %vm1098, %v1297, 0.0
    %v1422 = vadd.f32 %v1420, %v1421
    %v1423 = vsel %vm1098, %v1298, 0.0
    %v1424 = vadd.f32 %v1422, %v1423
    %v1425 = vsel %vm1098, %v1299, 0.0
    %v1426 = vadd.f32 %v1424, %v1425
    %v1427 = vrot.slane %v1426, 4
    %v1428 = vadd.f32 %v1426, %v1427
    %v1429 = vrot.slane %v1428, 2
    %v1430 = vadd.f32 %v1428, %v1429
    %v1431 = vrot.slane %v1430, 1
    %v1432 = vadd.f32 %v1430, %v1431
    %v1433 = vadd.f32 %v1235, %v1432
    %1434 = vst.msk [vmem:[#allocation4] sm:$0x1] %vm1233, %v1433
    %s1435 = sadd.s32 0, 0
    %s1436 = smul.u32 64, %s1435
    %p1437 = scmp.lt.s32.totalorder %s1436, 63
    %s1438 = scalar_select %p1437, %s1436, 63
    %s1439 = smul.addr %s1438, 4
    %s1440 = scalar_lea.vmem %s4, %s1439
    // Predicated region
    $region22: #{tpu_custom_call.1} parent=1 // pred_check
      _
    $region23: #{tpu_custom_call.1} parent=1 // pred_check_branch
      %1442 = sbr.rel (0) target = $region25
    $region24: #{tpu_custom_call.1} parent=1 // pred_region
      %s1443 = sadd.s32 0, 0
      %s1444 = smul.u32 64, %s1443
    $region25: #{tpu_custom_call.1} parent=1 // pred_fallthru
      _
    // Predicated region
    $region26: #{tpu_custom_call.1} parent=1 // pred_check
      _
    $region27: #{tpu_custom_call.1} parent=1 // pred_check_branch
      %1446 = sbr.rel (0) target = $region29
    $region28: #{tpu_custom_call.1} parent=1 // pred_region
      %s1448 = ssub.s32 16, 16
      %1449 = vsyncadd [#allocation3], %s1448
      %s1451 = sshll.u32 [#allocation2], 4
      %s1452 = int_to_ptr.vmem [resolvable:$true] %s1451
      %1454 = dma.vmem_to_hbm [thread:$0]  %s1452, 16, %s5, [#allocation3]
    $region29: #{tpu_custom_call.1} parent=1 // pred_fallthru
      _
    // Predicated region
    $region30: #{tpu_custom_call.1} parent=1 // pred_check
      _
    $region31: #{tpu_custom_call.1} parent=1 // pred_check_branch
      %1456 = sbr.rel (0) target = $region33
    $region32: #{tpu_custom_call.1} parent=1 // pred_region
      %s1458 = ssub.s32 16, 16
      %1459 = vsyncadd [#allocation5], %s1458
      %s1461 = sshll.u32 [#allocation4], 4
      %s1462 = int_to_ptr.vmem [resolvable:$true] %s1461
      %1464 = dma.vmem_to_hbm [thread:$0]  %s1462, 16, %s6, [#allocation5]
    $region33: #{tpu_custom_call.1} parent=1 // pred_fallthru
      _
    // Predicated region
    $region34: #{tpu_custom_call.1} parent=1 // pred_check
      _
    $region35: #{tpu_custom_call.1} parent=1 // pred_check_branch
      %1466 = sbr.rel (0) target = $region37
    $region36: #{tpu_custom_call.1} parent=1 // pred_region
      %s1467 = sadd.s32 0, 0
      %s1468 = smul.u32 64, %s1467
      %p1469 = scmp.lt.s32.totalorder %s1468, 63
      %s1470 = scalar_select %p1469, %s1468, 63
      %s1471 = smul.addr %s1470, 4
      %s1472 = scalar_lea.vmem %s4, %s1471
    $region37: #{tpu_custom_call.1} parent=1 // pred_fallthru
      _
    // Predicated region
    $region38: #{tpu_custom_call.1} parent=1 // pred_check
      _
    $region39: #{tpu_custom_call.1} parent=1 // pred_check_branch
      %1474 = sbr.rel (0) target = $region41
    $region40: #{tpu_custom_call.1} parent=1 // pred_region
      %1475 = dma.done [#allocation3], 16
    $region41: #{tpu_custom_call.1} parent=1 // pred_fallthru
      _
    // Predicated region
    $region42: #{tpu_custom_call.1} parent=1 // pred_check
      _
    $region43: #{tpu_custom_call.1} parent=1 // pred_check_branch
      %1477 = sbr.rel (0) target = $region45
    $region44: #{tpu_custom_call.1} parent=1 // pred_region
      %1478 = dma.done [#allocation5], 16
    $region45: #{tpu_custom_call.1} parent=1 // pred_fallthru
      _
    %1479 = vsyncpa [#allocation3], 1
    %1480 = vsyncpa [#allocation5], 1

</llo_original>
